<compile_context>
chip_gen: v6e
topology: v6e:2x2x1
jax: 0.10.0
libtpu: 0.0.40
codegen_flags: <defaults>
</compile_context>

<pallas_src>
import functools

import jax
import jax.numpy as jnp
from jax import lax
from jax.experimental import pallas as pl
from jax.experimental.pallas import tpu as pltpu

FACTOR_NUM = 32
D_USER = FACTOR_NUM            # 32
D_ITEM = FACTOR_NUM * 5        # 160
D_X2 = FACTOR_NUM              # 32
IN_DIM = FACTOR_NUM * 7        # 224
H1 = 256
H2 = 128

_STEP_OVERHEAD_ROWS = 1024     # ~0.35us per grid step expressed in row-equivalents


def _round_up(n, m):
    return ((n + m - 1) // m) * m


def _choose_tile(batch, block_b=1024):
    """Pick (tile_rows, padded_batch).

    Tiles are multiples of 128 rows so the lane-dense (1, tb) output block and
    the in-kernel (tb, H2) transpose stay fully (8,128)-aligned.  Among legal
    tiles we minimise padded-rows + per-grid-step overhead, preferring >= 2
    grid steps so v7x can shard the batch across its two TensorCores.
    """
    b8 = _round_up(batch, 128)
    if b8 <= 128:
        return 128, 128
    best_multi = best_any = None
    for tb in range(128, block_b + 1, 128):
        bp = _round_up(b8, tb)
        steps = bp // tb
        cost = bp + _STEP_OVERHEAD_ROWS * steps
        key = (cost, -tb)
        if best_any is None or key < best_any[0]:
            best_any = (key, tb, bp)
        if steps >= 2 and (best_multi is None or key < best_multi[0]):
            best_multi = (key, tb, bp)
    chosen = best_multi if best_multi is not None else best_any
    return chosen[1], chosen[2]


def _keep_mask(base_u32, rows, cols):
    """p=0.5 keep mask: mul-add with seeded counter -> xorshift -> mul -> top bit."""
    r = lax.broadcasted_iota(jnp.int32, (rows, cols), 0)
    c = lax.broadcasted_iota(jnp.int32, (rows, cols), 1)
    h = (r * cols + c).astype(jnp.uint32) * jnp.uint32(0x9E3779B1) + base_u32
    h = h ^ (h >> 15)
    h = h * jnp.uint32(0x2C1B3C6D)
    return h < jnp.uint32(0x80000000)      # top bit uniform -> keep prob 0.5


def _critic_kernel(seed_ref, x0_ref, x1_ref, x2_ref, w1_ref, b1_ref,
                   w2_ref, b2_ref, w3_ref, b3_ref, out_ref, *, apply_dropout):
    tb = x0_ref.shape[0]
    row0 = pl.program_id(0) * tb           # global row offset of this tile

    def drop_relu(h, salt):
        if not apply_dropout:               # eval mode: plain relu
            return jnp.maximum(h, 0.0)
        cols = h.shape[1]
        seed_u = seed_ref[0].astype(jnp.uint32)
        base = seed_u + jnp.uint32(salt) + (row0 * cols).astype(jnp.uint32)
        keep = _keep_mask(base, tb, cols)
        # relu folded into the kept branch; inverted scaling by 1/(1-p)=2.
        return jnp.where(keep, jnp.maximum(h, 0.0) * 2.0, 0.0)

    # ---- fc1: split-K matmuls over the three concat segments (bf16 MXU, f32 acc)
    h1 = jnp.dot(x0_ref[...], w1_ref[0:D_USER, :],
                 preferred_element_type=jnp.float32)
    h1 = h1 + jnp.dot(x1_ref[...], w1_ref[D_USER:D_USER + D_ITEM, :],
                      preferred_element_type=jnp.float32)
    h1 = h1 + jnp.dot(x2_ref[...], w1_ref[D_USER + D_ITEM:IN_DIM, :],
                      preferred_element_type=jnp.float32)
    h1 = drop_relu(h1 + b1_ref[...], 0x3243F6A9)

    # ---- fc2: N=128 on purpose (MXU far from the bottleneck; no zero padding)
    h2 = jnp.dot(h1.astype(jnp.bfloat16), w2_ref[...],
                 preferred_element_type=jnp.float32) + b2_ref[...]
    h2 = drop_relu(h2, 0x7F4A7C15)

    # ---- output head: aligned transpose (XLU) + sublane reduce -> lane-dense row
    hw = jnp.transpose(h2 * w3_ref[...])             # (H2, tb), fully tile-aligned
    out_ref[...] = jnp.sum(hw, axis=0, keepdims=True) + b3_ref[0]   # (1, tb)


def critic_mlp(seed, x0e, x1e, x2b, w1, b1, w2, b2, w3, b3,
               *, training=True, block_b=1024):
    B = x0e.shape[0]
    tb, Bp = _choose_tile(B, block_b)
    if Bp != B:
        pad = ((0, Bp - B), (0, 0))
        x0e = jnp.pad(x0e, pad)
        x1e = jnp.pad(x1e, pad)
        x2b = jnp.pad(x2b, pad)

    smem = pl.BlockSpec(memory_space=pltpu.MemorySpace.SMEM)
    kernel = functools.partial(_critic_kernel, apply_dropout=training)
    out = pl.pallas_call(
        kernel,
        out_shape=jax.ShapeDtypeStruct((1, Bp), jnp.float32),
        grid=(Bp // tb,),
        in_specs=[
            smem,                                              # seed  int32[1]
            pl.BlockSpec((tb, D_USER), lambda i: (i, 0)),      # x0e tile (bf16)
            pl.BlockSpec((tb, D_ITEM), lambda i: (i, 0)),      # x1e tile (bf16)
            pl.BlockSpec((tb, D_X2), lambda i: (i, 0)),        # x2  tile (bf16)
            pl.BlockSpec((IN_DIM, H1), lambda i: (0, 0)),      # w1 (VMEM resident)
            pl.BlockSpec((1, H1), lambda i: (0, 0)),           # b1
            pl.BlockSpec((H1, H2), lambda i: (0, 0)),          # w2 (VMEM resident)
            pl.BlockSpec((1, H2), lambda i: (0, 0)),           # b2
            pl.BlockSpec((1, H2), lambda i: (0, 0)),           # w3 as a row
            smem,                                              # b3    f32[1]
        ],
        out_specs=pl.BlockSpec((1, tb), lambda i: (0, i)),     # lane-dense output
        compiler_params=pltpu.CompilerParams(
            dimension_semantics=("parallel",)),
    )(seed, x0e, x1e, x2b, w1, b1, w2, b2, w3, b3)
    return out.reshape(Bp, 1)[:B]


@functools.partial(jax.jit, static_argnames=("training",))
def critic_forward(params, x0, x1, x2, seed, training=True):
    """Full Critic.forward. x0:[B] user ids, x1:[B,5] item ids, x2:[B,factor_num]."""
    # TODO(synk): embedding gathers stay in plain-JAX glue; move to in-kernel
    # scalar-prefetch row gathers if the tables grow beyond a few MiB.
    x0e = jnp.take(params["embed_user"], x0, axis=0).reshape(-1, D_USER)
    x1e = jnp.take(params["embed_item"], x1, axis=0).reshape(-1, D_ITEM)
    return critic_mlp(seed,
                      x0e.astype(jnp.bfloat16),
                      x1e.astype(jnp.bfloat16),
                      x2.astype(jnp.bfloat16),
                      params["w1"], params["b1"],
                      params["w2"], params["b2"],
                      params["w3"], params["b3"],
                      training=training)


def _ref_forward_eval(params, x0, x1, x2):
    """Pure-JAX eval-mode reference using the same bf16 cast points as the kernel."""
    x0e = jnp.take(params["embed_user"], x0, axis=0).reshape(-1, D_USER)
    x1e = jnp.take(params["embed_item"], x1, axis=0).reshape(-1, D_ITEM)
    feat = jnp.concatenate([x0e, x1e, x2], axis=1)
    feat = feat.astype(jnp.bfloat16).astype(jnp.float32)
    h1 = jnp.maximum(feat @ params["w1"].astype(jnp.float32) + params["b1"], 0.0)
    h1 = h1.astype(jnp.bfloat16).astype(jnp.float32)
    h2 = jnp.maximum(h1 @ params["w2"].astype(jnp.float32) + params["b2"], 0.0)
    return jnp.sum(h2 * params["w3"], axis=-1, keepdims=True) + params["b3"][0]


def init_params(key, num_users=10, num_items=20):
    ks = jax.random.split(key, 8)
    return {
        "embed_user": jax.random.normal(ks[0], (num_users, FACTOR_NUM), jnp.float32) * 0.1,
        "embed_item": jax.random.normal(ks[1], (num_items, FACTOR_NUM), jnp.float32) * 0.1,
        # fcN.weight ~ N(0, 0.1), stored transposed as [in, out]
        "w1": (jax.random.normal(ks[2], (IN_DIM, H1), jnp.float32) * 0.1).astype(jnp.bfloat16),
        "b1": jax.random.normal(ks[3], (1, H1), jnp.float32) * 0.1,
        "w2": (jax.random.normal(ks[4], (H1, H2), jnp.float32) * 0.1).astype(jnp.bfloat16),
        "b2": jax.random.normal(ks[5], (1, H2), jnp.float32) * 0.1,
        "w3": jax.random.normal(ks[6], (1, H2), jnp.float32) * 0.1,   # out.weight row
        "b3": jax.random.normal(ks[7], (1,), jnp.float32) * 0.1,
    }


if __name__ == "__main__":
    key = jax.random.PRNGKey(0)
    pkey, k0, k1, k2 = jax.random.split(key, 4)

    B = 8
    params = init_params(pkey)

    x0 = jax.random.randint(k0, (B,), 0, 10, dtype=jnp.int32)      # user ids
    x1 = jax.random.randint(k1, (B, 5), 0, 20, dtype=jnp.int32)    # 5 item ids each
    x2 = jax.random.normal(k2, (B, FACTOR_NUM), jnp.float32)       # action embedding
    seed = jnp.array([42], dtype=jnp.int32)                        # dropout seed

    # Training mode (matches the PyTorch module: F.dropout defaults training=True).
    value = jax.block_until_ready(
        critic_forward(params, x0, x1, x2, seed, training=True))
    assert value.shape == (B, 1) and value.dtype == jnp.float32
    assert bool(jnp.all(jnp.isfinite(value)))

    # Eval mode (dropout off) checked against a pure-JAX reference.
    value_eval = jax.block_until_ready(
        critic_forward(params, x0, x1, x2, seed, training=False))
    ref = _ref_forward_eval(params, x0, x1, x2)
    assert bool(jnp.allclose(value_eval, ref, rtol=2e-2, atol=2e-2))

    print("KERNEL_OK")
</pallas_src>

<mosaic_0001>
module attributes {stable_mosaic.version = 11 : i64} {
  func.func @_critic_kernel(%arg0: i32, %arg1: memref<1xi32, #tpu.memory_space<smem>>, %arg2: memref<128x32xbf16, #tpu.memory_space<vmem>>, %arg3: memref<128x160xbf16, #tpu.memory_space<vmem>>, %arg4: memref<128x32xbf16, #tpu.memory_space<vmem>>, %arg5: memref<224x256xbf16, #tpu.memory_space<vmem>>, %arg6: memref<1x256xf32, #tpu.memory_space<vmem>>, %arg7: memref<256x128xbf16, #tpu.memory_space<vmem>>, %arg8: memref<1x128xf32, #tpu.memory_space<vmem>>, %arg9: memref<1x128xf32, #tpu.memory_space<vmem>>, %arg10: memref<1xf32, #tpu.memory_space<smem>>, %arg11: memref<1x128xf32, #tpu.memory_space<vmem>>) attributes {dimension_semantics = [#tpu.dimension_semantics<parallel>], iteration_bounds = array<i64: 1>, scalar_prefetch = 0 : i64, scratch_operands = 0 : i64, tpu.core_type = #tpu.core_type<tc>, window_params = [{transform_indices = @transform_0, window_bounds = array<i64: 1>}, {transform_indices = @transform_1, window_bounds = array<i64: 128, 32>}, {transform_indices = @transform_2, window_bounds = array<i64: 128, 160>}, {transform_indices = @transform_3, window_bounds = array<i64: 128, 32>}, {pipeline_mode = #tpu.pipeline_mode<synchronous>, transform_indices = @transform_4, window_bounds = array<i64: 224, 256>}, {pipeline_mode = #tpu.pipeline_mode<synchronous>, transform_indices = @transform_5, window_bounds = array<i64: 1, 256>}, {pipeline_mode = #tpu.pipeline_mode<synchronous>, transform_indices = @transform_6, window_bounds = array<i64: 256, 128>}, {pipeline_mode = #tpu.pipeline_mode<synchronous>, transform_indices = @transform_7, window_bounds = array<i64: 1, 128>}, {pipeline_mode = #tpu.pipeline_mode<synchronous>, transform_indices = @transform_8, window_bounds = array<i64: 1, 128>}, {transform_indices = @transform_9, window_bounds = array<i64: 1>}, {transform_indices = @transform_10, window_bounds = array<i64: 1, 128>}]} {
    %c128_i32 = arith.constant 128 : i32
    %0 = arith.muli %arg0, %c128_i32 : i32
    %c0 = arith.constant 0 : index
    %c0_0 = arith.constant 0 : index
    %1 = vector.load %arg2[%c0, %c0_0] : memref<128x32xbf16, #tpu.memory_space<vmem>>, vector<128x32xbf16>
    %c0_1 = arith.constant 0 : index
    %c0_2 = arith.constant 0 : index
    %2 = vector.load %arg5[%c0_1, %c0_2] : memref<224x256xbf16, #tpu.memory_space<vmem>>, vector<32x256xbf16>
    %cst = arith.constant dense<0.000000e+00> : vector<128x256xf32>
    %3 = tpu.matmul %1, %2, %cst {dimension_numbers = #tpu.dot_dimension_numbers<[1], [0], [0], [1], [0, 0, 1, 1], [], []>} : vector<128x32xbf16>, vector<32x256xbf16>, vector<128x256xf32> -> vector<128x256xf32>
    %c0_3 = arith.constant 0 : index
    %c0_4 = arith.constant 0 : index
    %4 = vector.load %arg3[%c0_3, %c0_4] : memref<128x160xbf16, #tpu.memory_space<vmem>>, vector<128x160xbf16>
    %c32 = arith.constant 32 : index
    %c0_5 = arith.constant 0 : index
    %5 = vector.load %arg5[%c32, %c0_5] : memref<224x256xbf16, #tpu.memory_space<vmem>>, vector<160x256xbf16>
    %cst_6 = arith.constant dense<0.000000e+00> : vector<128x256xf32>
    %6 = tpu.matmul %4, %5, %cst_6 {dimension_numbers = #tpu.dot_dimension_numbers<[1], [0], [0], [1], [0, 0, 1, 1], [], []>} : vector<128x160xbf16>, vector<160x256xbf16>, vector<128x256xf32> -> vector<128x256xf32>
    %7 = arith.addf %3, %6 : vector<128x256xf32>
    %c0_7 = arith.constant 0 : index
    %c0_8 = arith.constant 0 : index
    %8 = vector.load %arg4[%c0_7, %c0_8] : memref<128x32xbf16, #tpu.memory_space<vmem>>, vector<128x32xbf16>
    %c192 = arith.constant 192 : index
    %c0_9 = arith.constant 0 : index
    %9 = vector.load %arg5[%c192, %c0_9] : memref<224x256xbf16, #tpu.memory_space<vmem>>, vector<32x256xbf16>
    %cst_10 = arith.constant dense<0.000000e+00> : vector<128x256xf32>
    %10 = tpu.matmul %8, %9, %cst_10 {dimension_numbers = #tpu.dot_dimension_numbers<[1], [0], [0], [1], [0, 0, 1, 1], [], []>} : vector<128x32xbf16>, vector<32x256xbf16>, vector<128x256xf32> -> vector<128x256xf32>
    %11 = arith.addf %7, %10 : vector<128x256xf32>
    %c0_11 = arith.constant 0 : index
    %c0_12 = arith.constant 0 : index
    %12 = vector.load %arg6[%c0_11, %c0_12] : memref<1x256xf32, #tpu.memory_space<vmem>>, vector<1x256xf32>
    %13 = vector.broadcast %12 : vector<1x256xf32> to vector<128x256xf32>
    %14 = arith.addf %11, %13 : vector<128x256xf32>
    %c0_13 = arith.constant 0 : index
    %15 = memref.load %arg1[%c0_13] : memref<1xi32, #tpu.memory_space<smem>>
    %c843314857_i32 = arith.constant 843314857 : i32
    %16 = arith.addi %15, %c843314857_i32 : i32
    %c256_i32 = arith.constant 256 : i32
    %17 = arith.muli %0, %c256_i32 : i32
    %18 = arith.addi %16, %17 : i32
    %19 = tpu.iota {dimensions = array<i32: 0>} : vector<128x256xi32>
    %20 = tpu.iota {dimensions = array<i32: 1>} : vector<128x256xi32>
    %c256_i32_14 = arith.constant 256 : i32
    %21 = vector.broadcast %c256_i32_14 : i32 to vector<128x256xi32>
    %22 = arith.muli %19, %21 : vector<128x256xi32>
    %23 = arith.addi %22, %20 : vector<128x256xi32>
    %c-1640531535_i32 = arith.constant -1640531535 : i32
    %24 = vector.broadcast %c-1640531535_i32 : i32 to vector<128x256xi32>
    %25 = arith.muli %23, %24 : vector<128x256xi32>
    %26 = vector.broadcast %18 : i32 to vector<128x256xi32>
    %27 = arith.addi %25, %26 : vector<128x256xi32>
    %c15_i32 = arith.constant 15 : i32
    %28 = vector.broadcast %c15_i32 : i32 to vector<128x256xi32>
    %29 = arith.shrui %27, %28 : vector<128x256xi32>
    %30 = arith.xori %27, %29 : vector<128x256xi32>
    %c739982445_i32 = arith.constant 739982445 : i32
    %31 = vector.broadcast %c739982445_i32 : i32 to vector<128x256xi32>
    %32 = arith.muli %30, %31 : vector<128x256xi32>
    %c-2147483648_i32 = arith.constant -2147483648 : i32
    %33 = vector.broadcast %c-2147483648_i32 : i32 to vector<128x256xi32>
    %34 = arith.cmpi ult, %32, %33 : vector<128x256xi32>
    %cst_15 = arith.constant 0.000000e+00 : f32
    %35 = vector.broadcast %cst_15 : f32 to vector<128x256xf32>
    %36 = arith.maximumf %14, %35 : vector<128x256xf32>
    %cst_16 = arith.constant 2.000000e+00 : f32
    %37 = vector.broadcast %cst_16 : f32 to vector<128x256xf32>
    %38 = arith.mulf %36, %37 : vector<128x256xf32>
    %cst_17 = arith.constant 0.000000e+00 : f32
    %39 = vector.broadcast %cst_17 : f32 to vector<128x256xf32>
    %40 = arith.select %34, %38, %39 : vector<128x256xi1>, vector<128x256xf32>
    %41 = arith.truncf %40 : vector<128x256xf32> to vector<128x256xbf16>
    %c0_18 = arith.constant 0 : index
    %c0_19 = arith.constant 0 : index
    %42 = vector.load %arg7[%c0_18, %c0_19] : memref<256x128xbf16, #tpu.memory_space<vmem>>, vector<256x128xbf16>
    %cst_20 = arith.constant dense<0.000000e+00> : vector<128x128xf32>
    %43 = tpu.matmul %41, %42, %cst_20 {dimension_numbers = #tpu.dot_dimension_numbers<[1], [0], [0], [1], [0, 0, 1, 1], [], []>} : vector<128x256xbf16>, vector<256x128xbf16>, vector<128x128xf32> -> vector<128x128xf32>
    %c0_21 = arith.constant 0 : index
    %c0_22 = arith.constant 0 : index
    %44 = vector.load %arg8[%c0_21, %c0_22] : memref<1x128xf32, #tpu.memory_space<vmem>>, vector<1x128xf32>
    %45 = vector.broadcast %44 : vector<1x128xf32> to vector<128x128xf32>
    %46 = arith.addf %43, %45 : vector<128x128xf32>
    %c0_23 = arith.constant 0 : index
    %47 = memref.load %arg1[%c0_23] : memref<1xi32, #tpu.memory_space<smem>>
    %c2135587861_i32 = arith.constant 2135587861 : i32
    %48 = arith.addi %47, %c2135587861_i32 : i32
    %c128_i32_24 = arith.constant 128 : i32
    %49 = arith.muli %0, %c128_i32_24 : i32
    %50 = arith.addi %48, %49 : i32
    %51 = tpu.iota {dimensions = array<i32: 0>} : vector<128x128xi32>
    %52 = tpu.iota {dimensions = array<i32: 1>} : vector<128x128xi32>
    %c128_i32_25 = arith.constant 128 : i32
    %53 = vector.broadcast %c128_i32_25 : i32 to vector<128x128xi32>
    %54 = arith.muli %51, %53 : vector<128x128xi32>
    %55 = arith.addi %54, %52 : vector<128x128xi32>
    %c-1640531535_i32_26 = arith.constant -1640531535 : i32
    %56 = vector.broadcast %c-1640531535_i32_26 : i32 to vector<128x128xi32>
    %57 = arith.muli %55, %56 : vector<128x128xi32>
    %58 = vector.broadcast %50 : i32 to vector<128x128xi32>
    %59 = arith.addi %57, %58 : vector<128x128xi32>
    %c15_i32_27 = arith.constant 15 : i32
    %60 = vector.broadcast %c15_i32_27 : i32 to vector<128x128xi32>
    %61 = arith.shrui %59, %60 : vector<128x128xi32>
    %62 = arith.xori %59, %61 : vector<128x128xi32>
    %c739982445_i32_28 = arith.constant 739982445 : i32
    %63 = vector.broadcast %c739982445_i32_28 : i32 to vector<128x128xi32>
    %64 = arith.muli %62, %63 : vector<128x128xi32>
    %c-2147483648_i32_29 = arith.constant -2147483648 : i32
    %65 = vector.broadcast %c-2147483648_i32_29 : i32 to vector<128x128xi32>
    %66 = arith.cmpi ult, %64, %65 : vector<128x128xi32>
    %cst_30 = arith.constant 0.000000e+00 : f32
    %67 = vector.broadcast %cst_30 : f32 to vector<128x128xf32>
    %68 = arith.maximumf %46, %67 : vector<128x128xf32>
    %cst_31 = arith.constant 2.000000e+00 : f32
    %69 = vector.broadcast %cst_31 : f32 to vector<128x128xf32>
    %70 = arith.mulf %68, %69 : vector<128x128xf32>
    %cst_32 = arith.constant 0.000000e+00 : f32
    %71 = vector.broadcast %cst_32 : f32 to vector<128x128xf32>
    %72 = arith.select %66, %70, %71 : vector<128x128xi1>, vector<128x128xf32>
    %c0_33 = arith.constant 0 : index
    %c0_34 = arith.constant 0 : index
    %73 = vector.load %arg9[%c0_33, %c0_34] : memref<1x128xf32, #tpu.memory_space<vmem>>, vector<1x128xf32>
    %74 = vector.broadcast %73 : vector<1x128xf32> to vector<128x128xf32>
    %75 = arith.mulf %72, %74 : vector<128x128xf32>
    %76 = tpu.transpose %75, [1, 0] : vector<128x128xf32> -> vector<128x128xf32>
    %cst_35 = arith.constant dense<0.000000e+00> : vector<128xf32>
    %77 = vector.multi_reduction <add>, %76, %cst_35 [0] : vector<128x128xf32> to vector<128xf32>
    %78 = vector.shape_cast %77 : vector<128xf32> to vector<1x128xf32>
    %c0_36 = arith.constant 0 : index
    %79 = memref.load %arg10[%c0_36] : memref<1xf32, #tpu.memory_space<smem>>
    %80 = vector.broadcast %79 : f32 to vector<1x128xf32>
    %81 = arith.addf %78, %80 : vector<1x128xf32>
    %c0_37 = arith.constant 0 : index
    %c0_38 = arith.constant 0 : index
    %82 = vector.load %arg11[%c0_37, %c0_38] : memref<1x128xf32, #tpu.memory_space<vmem>>, vector<1x128xf32>
    tpu.vector_store %arg11[%c0_37, %c0_38], %81 {strides = array<i32>} : memref<1x128xf32, #tpu.memory_space<vmem>>, vector<1x128xf32>,
    return
  }
  func.func @transform_0(%arg0: i32) -> i32 {
    %c0_i32 = arith.constant 0 : i32
    %c0_i32_0 = arith.constant 0 : i32
    return %c0_i32 : i32
  }
  func.func @transform_1(%arg0: i32) -> (i32, i32) {
    %c0_i32 = arith.constant 0 : i32
    %c0_i32_0 = arith.constant 0 : i32
    return %arg0, %c0_i32 : i32, i32
  }
  func.func @transform_2(%arg0: i32) -> (i32, i32) {
    %c0_i32 = arith.constant 0 : i32
    %c0_i32_0 = arith.constant 0 : i32
    return %arg0, %c0_i32 : i32, i32
  }
  func.func @transform_3(%arg0: i32) -> (i32, i32) {
    %c0_i32 = arith.constant 0 : i32
    %c0_i32_0 = arith.constant 0 : i32
    return %arg0, %c0_i32 : i32, i32
  }
  func.func @transform_4(%arg0: i32) -> (i32, i32) {
    %c0_i32 = arith.constant 0 : i32
    %c0_i32_0 = arith.constant 0 : i32
    %c0_i32_1 = arith.constant 0 : i32
    return %c0_i32, %c0_i32_0 : i32, i32
  }
  func.func @transform_5(%arg0: i32) -> (i32, i32) {
    %c0_i32 = arith.constant 0 : i32
    %c0_i32_0 = arith.constant 0 : i32
    %c0_i32_1 = arith.constant 0 : i32
    return %c0_i32, %c0_i32_0 : i32, i32
  }
  func.func @transform_6(%arg0: i32) -> (i32, i32) {
    %c0_i32 = arith.constant 0 : i32
    %c0_i32_0 = arith.constant 0 : i32
    %c0_i32_1 = arith.constant 0 : i32
    return %c0_i32, %c0_i32_0 : i32, i32
  }
  func.func @transform_7(%arg0: i32) -> (i32, i32) {
    %c0_i32 = arith.constant 0 : i32
    %c0_i32_0 = arith.constant 0 : i32
    %c0_i32_1 = arith.constant 0 : i32
    return %c0_i32, %c0_i32_0 : i32, i32
  }
  func.func @transform_8(%arg0: i32) -> (i32, i32) {
    %c0_i32 = arith.constant 0 : i32
    %c0_i32_0 = arith.constant 0 : i32
    %c0_i32_1 = arith.constant 0 : i32
    return %c0_i32, %c0_i32_0 : i32, i32
  }
  func.func @transform_9(%arg0: i32) -> i32 {
    %c0_i32 = arith.constant 0 : i32
    %c0_i32_0 = arith.constant 0 : i32
    return %c0_i32 : i32
  }
  func.func @transform_10(%arg0: i32) -> (i32, i32) {
    %c0_i32 = arith.constant 0 : i32
    %c0_i32_0 = arith.constant 0 : i32
    return %c0_i32, %arg0 : i32, i32
  }
}

</mosaic_0001>

<llo_original>
// kernel: critic_forward.1
$region0: #{critic_forward.1}
  #allocation0 [shape = 'u32[]', space=smem, size = 0x4, offset = 0x4, fixed_abs, tag = 'smem constant byte address 0x4 - core index']
  #allocation1 [shape = 'u32[144,128]{1,0:T(1,128)}', space=vmem, size = 0x12000, scoped, tag = 'internal scratch']
  #allocation2 [shape = 's32[1]{0:T(128)S(6)}', space=smem, size = 0x200, scoped, tag = 'scoped memory for critic_forward.1']
  #allocation3 [shape = 'f32[1]{0:T(128)S(6)}', space=smem, size = 0x200, scoped, tag = 'scoped memory for critic_forward.1']
  %s0 = inlined_call_operand.<no memory space> [shape: s32[1], index: 0, kind: input, shape index: {}]
  %s1 = inlined_call_operand.vmem [shape: bf16[128,32], index: 1, kind: input, shape index: {}]
  %s2 = inlined_call_operand.vmem [shape: bf16[128,160], index: 2, kind: input, shape index: {}]
  %s3 = inlined_call_operand.vmem [shape: bf16[128,32], index: 3, kind: input, shape index: {}]
  %s4 = inlined_call_operand.vmem [shape: bf16[224,256], index: 4, kind: input, shape index: {}]
  %s5 = inlined_call_operand.vmem [shape: f32[1,256], index: 5, kind: input, shape index: {}]
  %s6 = inlined_call_operand.vmem [shape: bf16[256,128], index: 6, kind: input, shape index: {}]
  %s7 = inlined_call_operand.vmem [shape: f32[1,128], index: 7, kind: input, shape index: {}]
  %s8 = inlined_call_operand.vmem [shape: f32[1,128], index: 8, kind: input, shape index: {}]
  %s9 = inlined_call_operand.<no memory space> [shape: f32[1], index: 9, kind: input, shape index: {}]
  %s10 = inlined_call_operand.vmem [shape: f32[1,128], index: 10, kind: output, shape index: {}]
  %s11 = sld [smem:[#allocation0]]
  $region50: #{critic_forward.1} parent=0
    _
  %s13 = ssub.s32 1, %s11
  %s14 = scalar_select 0, %s13, %s11
  %15 = sst [smem:[#allocation2]] %s0
  %16 = sst [smem:[#allocation3]] %s9
  // Predicated region
  $region2: #{critic_forward.1} parent=0 // pred_check
    _
  $region3: #{critic_forward.1} parent=0 // pred_check_branch
    %18 = sbr.rel (0) target = $region5
  $region4: #{critic_forward.1} parent=0 // pred_region
    _
  $region5: #{critic_forward.1} parent=0 // pred_fallthru
    _
  // Predicated region
  $region6: #{critic_forward.1} parent=0 // pred_check
    _
  $region7: #{critic_forward.1} parent=0 // pred_check_branch
    %20 = sbr.rel (0) target = $region9
  $region8: #{critic_forward.1} parent=0 // pred_region
    _
  $region9: #{critic_forward.1} parent=0 // pred_fallthru
    _
  // Predicated region
  $region10: #{critic_forward.1} parent=0 // pred_check
    _
  $region11: #{critic_forward.1} parent=0 // pred_check_branch
    %22 = sbr.rel (0) target = $region13
  $region12: #{critic_forward.1} parent=0 // pred_region
    _
  $region13: #{critic_forward.1} parent=0 // pred_fallthru
    _
  // Predicated region
  $region14: #{critic_forward.1} parent=0 // pred_check
    _
  $region15: #{critic_forward.1} parent=0 // pred_check_branch
    %24 = sbr.rel (0) target = $region17
  $region16: #{critic_forward.1} parent=0 // pred_region
    _
  $region17: #{critic_forward.1} parent=0 // pred_fallthru
    _
  // Predicated region
  $region18: #{critic_forward.1} parent=0 // pred_check
    _
  $region19: #{critic_forward.1} parent=0 // pred_check_branch
    %26 = sbr.rel (0) target = $region21
  $region20: #{critic_forward.1} parent=0 // pred_region
    _
  $region21: #{critic_forward.1} parent=0 // pred_fallthru
    _
  // Predicated region
  $region22: #{critic_forward.1} parent=0 // pred_check
    _
  $region23: #{critic_forward.1} parent=0 // pred_check_branch
    %28 = sbr.rel (0) target = $region25
  $region24: #{critic_forward.1} parent=0 // pred_region
    _
  $region25: #{critic_forward.1} parent=0 // pred_fallthru
    _
  // Predicated region
  $region26: #{critic_forward.1} parent=0 // pred_check
    _
  $region27: #{critic_forward.1} parent=0 // pred_check_branch
    %30 = sbr.rel (0) target = $region29
  $region28: #{critic_forward.1} parent=0 // pred_region
    _
  $region29: #{critic_forward.1} parent=0 // pred_fallthru
    _
  // Predicated region
  $region30: #{critic_forward.1} parent=0 // pred_check
    _
  $region31: #{critic_forward.1} parent=0 // pred_check_branch
    %32 = sbr.rel (0) target = $region33
  $region32: #{critic_forward.1} parent=0 // pred_region
    _
  $region33: #{critic_forward.1} parent=0 // pred_fallthru
    _
  // Predicated region
  $region34: #{critic_forward.1} parent=0 // pred_check
    _
  $region35: #{critic_forward.1} parent=0 // pred_check_branch
    %34 = sbr.rel (0) target = $region37
  $region36: #{critic_forward.1} parent=0 // pred_region
    _
  $region37: #{critic_forward.1} parent=0 // pred_fallthru
    _
  // Predicated region
  $region38: #{critic_forward.1} parent=0 // pred_check
    _
  $region39: #{critic_forward.1} parent=0 // pred_check_branch
    %36 = sbr.rel (0) target = $region41
  $region40: #{critic_forward.1} parent=0 // pred_region
    _
  $region41: #{critic_forward.1} parent=0 // pred_fallthru
    _
  %v38 = vld [vmem:[%s1] sm:$0xf]
  %v39 = vld [vmem:[%s1 + $0x4] sm:$0xf]
  %v40 = vld [vmem:[%s1 + $0x8] sm:$0xf]
  %v41 = vld [vmem:[%s1 + $0xc] sm:$0xf]
  %v42 = vld [vmem:[%s1 + $0x10] sm:$0xf]
  %v43 = vld [vmem:[%s1 + $0x14] sm:$0xf]
  %v44 = vld [vmem:[%s1 + $0x18] sm:$0xf]
  %v45 = vld [vmem:[%s1 + $0x1c] sm:$0xf]
  %v46 = vld [vmem:[%s1 + $0x20] sm:$0xf]
  %v47 = vld [vmem:[%s1 + $0x24] sm:$0xf]
  %v48 = vld [vmem:[%s1 + $0x28] sm:$0xf]
  %v49 = vld [vmem:[%s1 + $0x2c] sm:$0xf]
  %v50 = vld [vmem:[%s1 + $0x30] sm:$0xf]
  %v51 = vld [vmem:[%s1 + $0x34] sm:$0xf]
  %v52 = vld [vmem:[%s1 + $0x38] sm:$0xf]
  %v53 = vld [vmem:[%s1 + $0x3c] sm:$0xf]
  %v54 = vld [vmem:[%s4] sm:$0xff]
  %v55 = vld [vmem:[%s4 + $0x8] sm:$0xff]
  %v56 = vld [vmem:[%s4 + $0x10] sm:$0xff]
  %v57 = vld [vmem:[%s4 + $0x18] sm:$0xff]
  %v58 = vld [vmem:[%s2] sm:$0xff]
  %v59 = vld [vmem:[%s2 + $0x8] sm:$0xff]
  %v60 = vld [vmem:[%s2 + $0x10] sm:$0xff]
  %v61 = vld [vmem:[%s2 + $0x18] sm:$0xff]
  %v62 = vld [vmem:[%s2 + $0x20] sm:$0xff]
  %v63 = vld [vmem:[%s2 + $0x28] sm:$0xff]
  %v64 = vld [vmem:[%s2 + $0x30] sm:$0xff]
  %v65 = vld [vmem:[%s2 + $0x38] sm:$0xff]
  %v66 = vld [vmem:[%s2 + $0x40] sm:$0xff]
  %v67 = vld [vmem:[%s2 + $0x48] sm:$0xff]
  %v68 = vld [vmem:[%s2 + $0x50] sm:$0xff]
  %v69 = vld [vmem:[%s2 + $0x58] sm:$0xff]
  %v70 = vld [vmem:[%s2 + $0x60] sm:$0xff]
  %v71 = vld [vmem:[%s2 + $0x68] sm:$0xff]
  %v72 = vld [vmem:[%s2 + $0x70] sm:$0xff]
  %v73 = vld [vmem:[%s2 + $0x78] sm:$0xff]
  %v74 = vld [vmem:[%s4 + $0x20] sm:$0xff]
  %v75 = vld [vmem:[%s4 + $0x28] sm:$0xff]
  %v76 = vld [vmem:[%s4 + $0x30] sm:$0xff]
  %v77 = vld [vmem:[%s4 + $0x38] sm:$0xff]
  %v78 = vld [vmem:[%s4 + $0x40] sm:$0xff]
  %v79 = vld [vmem:[%s4 + $0x48] sm:$0xff]
  %v80 = vld [vmem:[%s4 + $0x50] sm:$0xff]
  %v81 = vld [vmem:[%s4 + $0x58] sm:$0xff]
  %v82 = vld [vmem:[%s4 + $0x60] sm:$0xff]
  %v83 = vld [vmem:[%s4 + $0x68] sm:$0xff]
  %v84 = vld [vmem:[%s4 + $0x70] sm:$0xff]
  %v85 = vld [vmem:[%s4 + $0x78] sm:$0xff]
  %v86 = vld [vmem:[%s4 + $0x80] sm:$0xff]
  %v87 = vld [vmem:[%s4 + $0x88] sm:$0xff]
  %v88 = vld [vmem:[%s4 + $0x90] sm:$0xff]
  %v89 = vld [vmem:[%s4 + $0x98] sm:$0xff]
  %v90 = vld [vmem:[%s4 + $0xa0] sm:$0xff]
  %v91 = vld [vmem:[%s4 + $0xa8] sm:$0xff]
  %v92 = vld [vmem:[%s4 + $0xb0] sm:$0xff]
  %v93 = vld [vmem:[%s4 + $0xb8] sm:$0xff]
  %v110 = vunpack.c.l.b16 %v58
  %v111 = vunpack.c.h.b16 %v58
  %v112 = vunpack.c.l.b16 %v59
  %v113 = vunpack.c.h.b16 %v59
  %v114 = vunpack.c.l.b16 %v60
  %v115 = vunpack.c.h.b16 %v60
  %v116 = vunpack.c.l.b16 %v61
  %v117 = vunpack.c.h.b16 %v61
  %v118 = vunpack.c.l.b16 %v62
  %v119 = vunpack.c.h.b16 %v62
  %v120 = vunpack.c.l.b16 %v63
  %v121 = vunpack.c.h.b16 %v63
  %v122 = vunpack.c.l.b16 %v64
  %v123 = vunpack.c.h.b16 %v64
  %v124 = vunpack.c.l.b16 %v65
  %v125 = vunpack.c.h.b16 %v65
  %v126 = vunpack.c.l.b16 %v66
  %v127 = vunpack.c.h.b16 %v66
  %v128 = vunpack.c.l.b16 %v67
  %v129 = vunpack.c.h.b16 %v67
  %v130 = vunpack.c.l.b16 %v68
  %v131 = vunpack.c.h.b16 %v68
  %v132 = vunpack.c.l.b16 %v69
  %v133 = vunpack.c.h.b16 %v69
  %v134 = vunpack.c.l.b16 %v70
  %v135 = vunpack.c.h.b16 %v70
  %v136 = vunpack.c.l.b16 %v71
  %v137 = vunpack.c.h.b16 %v71
  %v138 = vunpack.c.l.b16 %v72
  %v139 = vunpack.c.h.b16 %v72
  %v140 = vunpack.c.l.b16 %v73
  %v141 = vunpack.c.h.b16 %v73
  %v142 = vpack.c.b16 %v112, %v110
  %v143 = vpack.c.b16 %v113, %v111
  %v144 = vpack.c.b16 %v116, %v114
  %v145 = vpack.c.b16 %v117, %v115
  %v146 = vpack.c.b16 %v120, %v118
  %v147 = vpack.c.b16 %v121, %v119
  %v148 = vpack.c.b16 %v124, %v122
  %v149 = vpack.c.b16 %v125, %v123
  %v150 = vpack.c.b16 %v128, %v126
  %v151 = vpack.c.b16 %v129, %v127
  %v152 = vpack.c.b16 %v132, %v130
  %v153 = vpack.c.b16 %v133, %v131
  %v154 = vpack.c.b16 %v136, %v134
  %v155 = vpack.c.b16 %v137, %v135
  %v156 = vpack.c.b16 %v140, %v138
  %v157 = vpack.c.b16 %v141, %v139
  %v186 = vunpack.c.l.b16 %v74
  %v187 = vunpack.c.h.b16 %v74
  %v188 = vunpack.c.l.b16 %v75
  %v189 = vunpack.c.h.b16 %v75
  %v190 = vunpack.c.l.b16 %v76
  %v191 = vunpack.c.h.b16 %v76
  %v192 = vunpack.c.l.b16 %v77
  %v193 = vunpack.c.h.b16 %v77
  %v194 = vunpack.c.l.b16 %v78
  %v195 = vunpack.c.h.b16 %v78
  %v196 = vunpack.c.l.b16 %v79
  %v197 = vunpack.c.h.b16 %v79
  %v198 = vunpack.c.l.b16 %v80
  %v199 = vunpack.c.h.b16 %v80
  %v200 = vunpack.c.l.b16 %v81
  %v201 = vunpack.c.h.b16 %v81
  %v202 = vunpack.c.l.b16 %v82
  %v203 = vunpack.c.h.b16 %v82
  %v204 = vunpack.c.l.b16 %v83
  %v205 = vunpack.c.h.b16 %v83
  %v206 = vunpack.c.l.b16 %v84
  %v207 = vunpack.c.h.b16 %v84
  %v208 = vunpack.c.l.b16 %v85
  %v209 = vunpack.c.h.b16 %v85
  %v210 = vunpack.c.l.b16 %v86
  %v211 = vunpack.c.h.b16 %v86
  %v212 = vunpack.c.l.b16 %v87
  %v213 = vunpack.c.h.b16 %v87
  %v214 = vunpack.c.l.b16 %v88
  %v215 = vunpack.c.h.b16 %v88
  %v216 = vunpack.c.l.b16 %v89
  %v217 = vunpack.c.h.b16 %v89
  %v218 = vunpack.c.l.b16 %v90
  %v219 = vunpack.c.h.b16 %v90
  %v220 = vunpack.c.l.b16 %v91
  %v221 = vunpack.c.h.b16 %v91
  %v222 = vunpack.c.l.b16 %v92
  %v223 = vunpack.c.h.b16 %v92
  %v224 = vunpack.c.l.b16 %v93
  %v225 = vunpack.c.h.b16 %v93
  %v226 = vpack.c.b16 %v188, %v186
  %v227 = vpack.c.b16 %v189, %v187
  %v228 = vpack.c.b16 %v192, %v190
  %v229 = vpack.c.b16 %v193, %v191
  %v230 = vpack.c.b16 %v196, %v194
  %v231 = vpack.c.b16 %v197, %v195
  %v232 = vpack.c.b16 %v200, %v198
  %v233 = vpack.c.b16 %v201, %v199
  %v234 = vpack.c.b16 %v204, %v202
  %v235 = vpack.c.b16 %v205, %v203
  %v236 = vpack.c.b16 %v208, %v206
  %v237 = vpack.c.b16 %v209, %v207
  %v238 = vpack.c.b16 %v212, %v210
  %v239 = vpack.c.b16 %v213, %v211
  %v240 = vpack.c.b16 %v216, %v214
  %v241 = vpack.c.b16 %v217, %v215
  %v242 = vpack.c.b16 %v220, %v218
  %v243 = vpack.c.b16 %v221, %v219
  %v244 = vpack.c.b16 %v224, %v222
  %v245 = vpack.c.b16 %v225, %v223
  %vm266 = vcmask 261120
  %v268 = vsel %vm266, %v143, 0
  %v271 = vsel %vm266, %v145, 0
  %v274 = vsel %vm266, %v147, 0
  %v277 = vsel %vm266, %v149, 0
  %v280 = vsel %vm266, %v151, 0
  %v283 = vsel %vm266, %v153, 0
  %v286 = vsel %vm266, %v155, 0
  %v289 = vsel %vm266, %v157, 0
  %291 = vmatprep.subr.bf16.mxu0 %v241
  %292 = vmatpush1.bf16.msra.mxu0 %v240
  %293 = vmatprep.subr.bf16.mxu0 %v239
  %294 = vmatpush1.bf16.msra.mxu0 %v238
  %295 = vmatprep.subr.bf16.mxu0 %v237
  %296 = vmatpush1.bf16.msra.mxu0 %v236
  %297 = vmatprep.subr.bf16.mxu0 %v235
  %298 = vmatpush1.bf16.msra.mxu0 %v234
  %299 = vmatprep.subr.bf16.mxu0 %v233
  %300 = vmatpush1.bf16.msra.mxu0 %v232
  %301 = vmatprep.subr.bf16.mxu0 %v231
  %302 = vmatpush1.bf16.msra.mxu0 %v230
  %303 = vmatprep.subr.bf16.mxu0 %v229
  %304 = vmatpush1.bf16.msra.mxu0 %v228
  %305 = vmatprep.subr.bf16.mxu0 %v227
  %306 = vmatpush1.bf16.msra.mxu0 %v226
  %307 = vmatprep.subr.bf16.mxu0 0
  %308 = vmatpush2.bf16.msra.mxu0 0
  %309 = vmatprep.subr.bf16.mxu0 0
  %310 = vmatpush2.bf16.msra.mxu0 0
  %311 = vmatprep.subr.bf16.mxu0 0
  %312 = vmatpush2.bf16.msra.mxu0 0
  %313 = vmatprep.subr.bf16.mxu0 0
  %314 = vmatpush2.bf16.msra.mxu0 0
  %315 = vmatprep.subr.bf16.mxu0 0
  %316 = vmatpush2.bf16.msra.mxu0 0
  %317 = vmatprep.subr.bf16.mxu0 0
  %318 = vmatpush2.bf16.msra.mxu0 0
  %319 = vmatprep.subr.bf16.mxu0 %v245
  %320 = vmatpush2.bf16.msra.mxu0 %v244
  %321 = vmatprep.subr.bf16.mxu0 %v243
  %322 = vmatpush2.bf16.msra.mxu0 %v242
  %323 = vmatprep.mubr.bf16.mxu0 %v268
  %324 = vmatmul.mubr.bf16.gmra.mxu0 %v142
  %v325 = vpop.f32.mrf.mxu0
  %v326 = vadd.f32 0.0, %v325
  %v327 = vpop.f32.mrf.mxu0
  %v328 = vadd.f32 0.0, %v327
  %v329 = vpop.f32.mrf.mxu0
  %v330 = vadd.f32 0.0, %v329
  %v331 = vpop.f32.mrf.mxu0
  %v332 = vadd.f32 0.0, %v331
  %333 = vmatprep.mubr.bf16.mxu0 %v271
  %334 = vmatmul.mubr.bf16.gmra.mxu0 %v144
  %v335 = vpop.f32.mrf.mxu0
  %v336 = vadd.f32 0.0, %v335
  %v337 = vpop.f32.mrf.mxu0
  %v338 = vadd.f32 0.0, %v337
  %v339 = vpop.f32.mrf.mxu0
  %v340 = vadd.f32 0.0, %v339
  %v341 = vpop.f32.mrf.mxu0
  %v342 = vadd.f32 0.0, %v341
  %343 = vmatprep.mubr.bf16.mxu0 %v274
  %344 = vmatmul.mubr.bf16.gmra.mxu0 %v146
  %v345 = vpop.f32.mrf.mxu0
  %v346 = vadd.f32 0.0, %v345
  %v347 = vpop.f32.mrf.mxu0
  %v348 = vadd.f32 0.0, %v347
  %v349 = vpop.f32.mrf.mxu0
  %v350 = vadd.f32 0.0, %v349
  %v351 = vpop.f32.mrf.mxu0
  %v352 = vadd.f32 0.0, %v351
  %353 = vmatprep.mubr.bf16.mxu0 %v277
  %354 = vmatmul.mubr.bf16.gmra.mxu0 %v148
  %v355 = vpop.f32.mrf.mxu0
  %v356 = vadd.f32 0.0, %v355
  %v357 = vpop.f32.mrf.mxu0
  %v358 = vadd.f32 0.0, %v357
  %v359 = vpop.f32.mrf.mxu0
  %v360 = vadd.f32 0.0, %v359
  %v361 = vpop.f32.mrf.mxu0
  %v362 = vadd.f32 0.0, %v361
  %363 = vmatprep.mubr.bf16.mxu0 %v280
  %364 = vmatmul.mubr.bf16.gmra.mxu0 %v150
  %v365 = vpop.f32.mrf.mxu0
  %v366 = vadd.f32 0.0, %v365
  %v367 = vpop.f32.mrf.mxu0
  %v368 = vadd.f32 0.0, %v367
  %v369 = vpop.f32.mrf.mxu0
  %v370 = vadd.f32 0.0, %v369
  %v371 = vpop.f32.mrf.mxu0
  %v372 = vadd.f32 0.0, %v371
  %373 = vmatprep.mubr.bf16.mxu0 %v283
  %374 = vmatmul.mubr.bf16.gmra.mxu0 %v152
  %v375 = vpop.f32.mrf.mxu0
  %v376 = vadd.f32 0.0, %v375
  %v377 = vpop.f32.mrf.mxu0
  %v378 = vadd.f32 0.0, %v377
  %v379 = vpop.f32.mrf.mxu0
  %v380 = vadd.f32 0.0, %v379
  %v381 = vpop.f32.mrf.mxu0
  %v382 = vadd.f32 0.0, %v381
  %383 = vmatprep.mubr.bf16.mxu0 %v286
  %384 = vmatmul.mubr.bf16.gmra.mxu0 %v154
  %v385 = vpop.f32.mrf.mxu0
  %v386 = vadd.f32 0.0, %v385
  %v387 = vpop.f32.mrf.mxu0
  %v388 = vadd.f32 0.0, %v387
  %v389 = vpop.f32.mrf.mxu0
  %v390 = vadd.f32 0.0, %v389
  %v391 = vpop.f32.mrf.mxu0
  %v392 = vadd.f32 0.0, %v391
  %393 = vmatprep.mubr.bf16.mxu0 %v289
  %394 = vmatmul.mubr.bf16.gmra.mxu0 %v156
  %v395 = vpop.f32.mrf.mxu0
  %v396 = vadd.f32 0.0, %v395
  %v397 = vpop.f32.mrf.mxu0
  %v398 = vadd.f32 0.0, %v397
  %v399 = vpop.f32.mrf.mxu0
  %v400 = vadd.f32 0.0, %v399
  %v401 = vpop.f32.mrf.mxu0
  %v402 = vadd.f32 0.0, %v401
  %403 = vdwg.mxu0
  %v420 = vunpack.c.l.b16 %v38
  %v421 = vunpack.c.l.b16 %v39
  %v422 = vunpack.c.l.b16 %v40
  %v423 = vunpack.c.l.b16 %v41
  %v424 = vunpack.c.l.b16 %v42
  %v425 = vunpack.c.l.b16 %v43
  %v426 = vunpack.c.l.b16 %v44
  %v427 = vunpack.c.l.b16 %v45
  %v428 = vunpack.c.l.b16 %v46
  %v429 = vunpack.c.l.b16 %v47
  %v430 = vunpack.c.l.b16 %v48
  %v431 = vunpack.c.l.b16 %v49
  %v432 = vunpack.c.l.b16 %v50
  %v433 = vunpack.c.l.b16 %v51
  %v434 = vunpack.c.l.b16 %v52
  %v435 = vunpack.c.l.b16 %v53
  %v436 = vpack.c.b16 %v421, %v420
  %v437 = vpack.c.b16 %v423, %v422
  %v438 = vpack.c.b16 %v425, %v424
  %v439 = vpack.c.b16 %v427, %v426
  %v440 = vpack.c.b16 %v429, %v428
  %v441 = vpack.c.b16 %v431, %v430
  %v442 = vpack.c.b16 %v433, %v432
  %v443 = vpack.c.b16 %v435, %v434
  %v448 = vunpack.c.l.b16 %v54
  %v449 = vunpack.c.h.b16 %v54
  %v450 = vunpack.c.l.b16 %v55
  %v451 = vunpack.c.h.b16 %v55
  %v452 = vunpack.c.l.b16 %v56
  %v453 = vunpack.c.h.b16 %v56
  %v454 = vunpack.c.l.b16 %v57
  %v455 = vunpack.c.h.b16 %v57
  %v456 = vpack.c.b16 %v450, %v448
  %v457 = vpack.c.b16 %v451, %v449
  %v458 = vpack.c.b16 %v454, %v452
  %v459 = vpack.c.b16 %v455, %v453
  %v465 = vsel %vm266, %v436, 0
  %v468 = vsel %vm266, %v437, 0
  %v471 = vsel %vm266, %v438, 0
  %v474 = vsel %vm266, %v439, 0
  %v477 = vsel %vm266, %v440, 0
  %v480 = vsel %vm266, %v441, 0
  %v483 = vsel %vm266, %v442, 0
  %v486 = vsel %vm266, %v443, 0
  %488 = vmatprep.subr.bf16.mxu0 0
  %489 = vmatpush1.bf16.msra.mxu0 0
  %490 = vmatprep.subr.bf16.mxu0 0
  %491 = vmatpush1.bf16.msra.mxu0 0
  %492 = vmatprep.subr.bf16.mxu0 0
  %493 = vmatpush1.bf16.msra.mxu0 0
  %494 = vmatprep.subr.bf16.mxu0 0
  %495 = vmatpush1.bf16.msra.mxu0 0
  %496 = vmatprep.subr.bf16.mxu0 0
  %497 = vmatpush1.bf16.msra.mxu0 0
  %498 = vmatprep.subr.bf16.mxu0 0
  %499 = vmatpush1.bf16.msra.mxu0 0
  %500 = vmatprep.subr.bf16.mxu0 %v459
  %501 = vmatpush1.bf16.msra.mxu0 %v458
  %502 = vmatprep.subr.bf16.mxu0 %v457
  %503 = vmatpush1.bf16.msra.mxu0 %v456
  %504 = vmatprep.subr.bf16.mxu0 0
  %505 = vmatpush2.bf16.msra.mxu0 0
  %506 = vmatprep.subr.bf16.mxu0 0
  %507 = vmatpush2.bf16.msra.mxu0 0
  %508 = vmatprep.subr.bf16.mxu0 0
  %509 = vmatpush2.bf16.msra.mxu0 0
  %510 = vmatprep.subr.bf16.mxu0 0
  %511 = vmatpush2.bf16.msra.mxu0 0
  %512 = vmatprep.subr.bf16.mxu0 0
  %513 = vmatpush2.bf16.msra.mxu0 0
  %514 = vmatprep.subr.bf16.mxu0 0
  %515 = vmatpush2.bf16.msra.mxu0 0
  %516 = vmatprep.subr.bf16.mxu0 0
  %517 = vmatpush2.bf16.msra.mxu0 0
  %518 = vmatprep.subr.bf16.mxu0 0
  %519 = vmatpush2.bf16.msra.mxu0 0
  %520 = vmatprep.mubr.bf16.mxu0 0
  %521 = vmatmul.mubr.bf16.gmra.mxu0 %v465
  %v522 = vpop.f32.mrf.mxu0
  %v523 = vadd.f32 %v326, %v522
  %v524 = vpop.f32.mrf.mxu0
  %v525 = vadd.f32 %v328, %v524
  %v526 = vpop.f32.mrf.mxu0
  %v527 = vadd.f32 %v330, %v526
  %v528 = vpop.f32.mrf.mxu0
  %v529 = vadd.f32 %v332, %v528
  %530 = vmatprep.mubr.bf16.mxu0 0
  %531 = vmatmul.mubr.bf16.gmra.mxu0 %v468
  %v532 = vpop.f32.mrf.mxu0
  %v533 = vadd.f32 %v336, %v532
  %v534 = vpop.f32.mrf.mxu0
  %v535 = vadd.f32 %v338, %v534
  %v536 = vpop.f32.mrf.mxu0
  %v537 = vadd.f32 %v340, %v536
  %v538 = vpop.f32.mrf.mxu0
  %v539 = vadd.f32 %v342, %v538
  %540 = vmatprep.mubr.bf16.mxu0 0
  %541 = vmatmul.mubr.bf16.gmra.mxu0 %v471
  %v542 = vpop.f32.mrf.mxu0
  %v543 = vadd.f32 %v346, %v542
  %v544 = vpop.f32.mrf.mxu0
  %v545 = vadd.f32 %v348, %v544
  %v546 = vpop.f32.mrf.mxu0
  %v547 = vadd.f32 %v350, %v546
  %v548 = vpop.f32.mrf.mxu0
  %v549 = vadd.f32 %v352, %v548
  %550 = vmatprep.mubr.bf16.mxu0 0
  %551 = vmatmul.mubr.bf16.gmra.mxu0 %v474
  %v552 = vpop.f32.mrf.mxu0
  %v553 = vadd.f32 %v356, %v552
  %v554 = vpop.f32.mrf.mxu0
  %v555 = vadd.f32 %v358, %v554
  %v556 = vpop.f32.mrf.mxu0
  %v557 = vadd.f32 %v360, %v556
  %v558 = vpop.f32.mrf.mxu0
  %v559 = vadd.f32 %v362, %v558
  %560 = vmatprep.mubr.bf16.mxu0 0
  %561 = vmatmul.mubr.bf16.gmra.mxu0 %v477
  %v562 = vpop.f32.mrf.mxu0
  %v563 = vadd.f32 %v366, %v562
  %v564 = vpop.f32.mrf.mxu0
  %v565 = vadd.f32 %v368, %v564
  %v566 = vpop.f32.mrf.mxu0
  %v567 = vadd.f32 %v370, %v566
  %v568 = vpop.f32.mrf.mxu0
  %v569 = vadd.f32 %v372, %v568
  %570 = vmatprep.mubr.bf16.mxu0 0
  %571 = vmatmul.mubr.bf16.gmra.mxu0 %v480
  %v572 = vpop.f32.mrf.mxu0
  %v573 = vadd.f32 %v376, %v572
  %v574 = vpop.f32.mrf.mxu0
  %v575 = vadd.f32 %v378, %v574
  %v576 = vpop.f32.mrf.mxu0
  %v577 = vadd.f32 %v380, %v576
  %v578 = vpop.f32.mrf.mxu0
  %v579 = vadd.f32 %v382, %v578
  %580 = vmatprep.mubr.bf16.mxu0 0
  %581 = vmatmul.mubr.bf16.gmra.mxu0 %v483
  %v582 = vpop.f32.mrf.mxu0
  %v583 = vadd.f32 %v386, %v582
  %v584 = vpop.f32.mrf.mxu0
  %v585 = vadd.f32 %v388, %v584
  %v586 = vpop.f32.mrf.mxu0
  %v587 = vadd.f32 %v390, %v586
  %v588 = vpop.f32.mrf.mxu0
  %v589 = vadd.f32 %v392, %v588
  %590 = vmatprep.mubr.bf16.mxu0 0
  %591 = vmatmul.mubr.bf16.gmra.mxu0 %v486
  %v592 = vpop.f32.mrf.mxu0
  %v593 = vadd.f32 %v396, %v592
  %v594 = vpop.f32.mrf.mxu0
  %v595 = vadd.f32 %v398, %v594
  %v596 = vpop.f32.mrf.mxu0
  %v597 = vadd.f32 %v400, %v596
  %v598 = vpop.f32.mrf.mxu0
  %v599 = vadd.f32 %v402, %v598
  %600 = vdwg.mxu0
  %v601 = vld [vmem:[%s3] sm:$0xf]
  %v602 = vld [vmem:[%s3 + $0x4] sm:$0xf]
  %v603 = vld [vmem:[%s3 + $0x8] sm:$0xf]
  %v604 = vld [vmem:[%s3 + $0xc] sm:$0xf]
  %v605 = vld [vmem:[%s3 + $0x10] sm:$0xf]
  %v606 = vld [vmem:[%s3 + $0x14] sm:$0xf]
  %v607 = vld [vmem:[%s3 + $0x18] sm:$0xf]
  %v608 = vld [vmem:[%s3 + $0x1c] sm:$0xf]
  %v609 = vld [vmem:[%s3 + $0x20] sm:$0xf]
  %v610 = vld [vmem:[%s3 + $0x24] sm:$0xf]
  %v611 = vld [vmem:[%s3 + $0x28] sm:$0xf]
  %v612 = vld [vmem:[%s3 + $0x2c] sm:$0xf]
  %v613 = vld [vmem:[%s3 + $0x30] sm:$0xf]
  %v614 = vld [vmem:[%s3 + $0x34] sm:$0xf]
  %v615 = vld [vmem:[%s3 + $0x38] sm:$0xf]
  %v616 = vld [vmem:[%s3 + $0x3c] sm:$0xf]
  %v617 = vld [vmem:[%s4 + $0xc0] sm:$0xff]
  %v618 = vld [vmem:[%s4 + $0xc8] sm:$0xff]
  %v619 = vld [vmem:[%s4 + $0xd0] sm:$0xff]
  %v620 = vld [vmem:[%s4 + $0xd8] sm:$0xff]
  %v637 = vunpack.c.l.b16 %v601
  %v638 = vunpack.c.l.b16 %v602
  %v639 = vunpack.c.l.b16 %v603
  %v640 = vunpack.c.l.b16 %v604
  %v641 = vunpack.c.l.b16 %v605
  %v642 = vunpack.c.l.b16 %v606
  %v643 = vunpack.c.l.b16 %v607
  %v644 = vunpack.c.l.b16 %v608
  %v645 = vunpack.c.l.b16 %v609
  %v646 = vunpack.c.l.b16 %v610
  %v647 = vunpack.c.l.b16 %v611
  %v648 = vunpack.c.l.b16 %v612
  %v649 = vunpack.c.l.b16 %v613
  %v650 = vunpack.c.l.b16 %v614
  %v651 = vunpack.c.l.b16 %v615
  %v652 = vunpack.c.l.b16 %v616
  %v653 = vpack.c.b16 %v638, %v637
  %v654 = vpack.c.b16 %v640, %v639
  %v655 = vpack.c.b16 %v642, %v641
  %v656 = vpack.c.b16 %v644, %v643
  %v657 = vpack.c.b16 %v646, %v645
  %v658 = vpack.c.b16 %v648, %v647
  %v659 = vpack.c.b16 %v650, %v649
  %v660 = vpack.c.b16 %v652, %v651
  %v665 = vunpack.c.l.b16 %v617
  %v666 = vunpack.c.h.b16 %v617
  %v667 = vunpack.c.l.b16 %v618
  %v668 = vunpack.c.h.b16 %v618
  %v669 = vunpack.c.l.b16 %v619
  %v670 = vunpack.c.h.b16 %v619
  %v671 = vunpack.c.l.b16 %v620
  %v672 = vunpack.c.h.b16 %v620
  %v673 = vpack.c.b16 %v667, %v665
  %v674 = vpack.c.b16 %v668, %v666
  %v675 = vpack.c.b16 %v671, %v669
  %v676 = vpack.c.b16 %v672, %v670
  %v682 = vsel %vm266, %v653, 0
  %v685 = vsel %vm266, %v654, 0
  %v688 = vsel %vm266, %v655, 0
  %v691 = vsel %vm266, %v656, 0
  %v694 = vsel %vm266, %v657, 0
  %v697 = vsel %vm266, %v658, 0
  %v700 = vsel %vm266, %v659, 0
  %v703 = vsel %vm266, %v660, 0
  %705 = vmatprep.subr.bf16.mxu0 0
  %706 = vmatpush1.bf16.msra.mxu0 0
  %707 = vmatprep.subr.bf16.mxu0 0
  %708 = vmatpush1.bf16.msra.mxu0 0
  %709 = vmatprep.subr.bf16.mxu0 0
  %710 = vmatpush1.bf16.msra.mxu0 0
  %711 = vmatprep.subr.bf16.mxu0 0
  %712 = vmatpush1.bf16.msra.mxu0 0
  %713 = vmatprep.subr.bf16.mxu0 0
  %714 = vmatpush1.bf16.msra.mxu0 0
  %715 = vmatprep.subr.bf16.mxu0 0
  %716 = vmatpush1.bf16.msra.mxu0 0
  %717 = vmatprep.subr.bf16.mxu0 %v676
  %718 = vmatpush1.bf16.msra.mxu0 %v675
  %719 = vmatprep.subr.bf16.mxu0 %v674
  %720 = vmatpush1.bf16.msra.mxu0 %v673
  %721 = vmatprep.subr.bf16.mxu0 0
  %722 = vmatpush2.bf16.msra.mxu0 0
  %723 = vmatprep.subr.bf16.mxu0 0
  %724 = vmatpush2.bf16.msra.mxu0 0
  %725 = vmatprep.subr.bf16.mxu0 0
  %726 = vmatpush2.bf16.msra.mxu0 0
  %727 = vmatprep.subr.bf16.mxu0 0
  %728 = vmatpush2.bf16.msra.mxu0 0
  %729 = vmatprep.subr.bf16.mxu0 0
  %730 = vmatpush2.bf16.msra.mxu0 0
  %731 = vmatprep.subr.bf16.mxu0 0
  %732 = vmatpush2.bf16.msra.mxu0 0
  %733 = vmatprep.subr.bf16.mxu0 0
  %734 = vmatpush2.bf16.msra.mxu0 0
  %735 = vmatprep.subr.bf16.mxu0 0
  %736 = vmatpush2.bf16.msra.mxu0 0
  %737 = vmatprep.mubr.bf16.mxu0 0
  %738 = vmatmul.mubr.bf16.gmra.mxu0 %v682
  %v739 = vpop.f32.mrf.mxu0
  %v740 = vadd.f32 0.0, %v739
  %v741 = vpop.f32.mrf.mxu0
  %v742 = vadd.f32 0.0, %v741
  %v743 = vpop.f32.mrf.mxu0
  %v744 = vadd.f32 0.0, %v743
  %v745 = vpop.f32.mrf.mxu0
  %v746 = vadd.f32 0.0, %v745
  %747 = vmatprep.mubr.bf16.mxu0 0
  %748 = vmatmul.mubr.bf16.gmra.mxu0 %v685
  %v749 = vpop.f32.mrf.mxu0
  %v750 = vadd.f32 0.0, %v749
  %v751 = vpop.f32.mrf.mxu0
  %v752 = vadd.f32 0.0, %v751
  %v753 = vpop.f32.mrf.mxu0
  %v754 = vadd.f32 0.0, %v753
  %v755 = vpop.f32.mrf.mxu0
  %v756 = vadd.f32 0.0, %v755
  %757 = vmatprep.mubr.bf16.mxu0 0
  %758 = vmatmul.mubr.bf16.gmra.mxu0 %v688
  %v759 = vpop.f32.mrf.mxu0
  %v760 = vadd.f32 0.0, %v759
  %v761 = vpop.f32.mrf.mxu0
  %v762 = vadd.f32 0.0, %v761
  %v763 = vpop.f32.mrf.mxu0
  %v764 = vadd.f32 0.0, %v763
  %v765 = vpop.f32.mrf.mxu0
  %v766 = vadd.f32 0.0, %v765
  %767 = vmatprep.mubr.bf16.mxu0 0
  %768 = vmatmul.mubr.bf16.gmra.mxu0 %v691
  %v769 = vpop.f32.mrf.mxu0
  %v770 = vadd.f32 0.0, %v769
  %v771 = vpop.f32.mrf.mxu0
  %v772 = vadd.f32 0.0, %v771
  %v773 = vpop.f32.mrf.mxu0
  %v774 = vadd.f32 0.0, %v773
  %v775 = vpop.f32.mrf.mxu0
  %v776 = vadd.f32 0.0, %v775
  %777 = vmatprep.mubr.bf16.mxu0 0
  %778 = vmatmul.mubr.bf16.gmra.mxu0 %v694
  %v779 = vpop.f32.mrf.mxu0
  %v780 = vadd.f32 0.0, %v779
  %v781 = vpop.f32.mrf.mxu0
  %v782 = vadd.f32 0.0, %v781
  %v783 = vpop.f32.mrf.mxu0
  %v784 = vadd.f32 0.0, %v783
  %v785 = vpop.f32.mrf.mxu0
  %v786 = vadd.f32 0.0, %v785
  %787 = vmatprep.mubr.bf16.mxu0 0
  %788 = vmatmul.mubr.bf16.gmra.mxu0 %v697
  %v789 = vpop.f32.mrf.mxu0
  %v790 = vadd.f32 0.0, %v789
  %v791 = vpop.f32.mrf.mxu0
  %v792 = vadd.f32 0.0, %v791
  %v793 = vpop.f32.mrf.mxu0
  %v794 = vadd.f32 0.0, %v793
  %v795 = vpop.f32.mrf.mxu0
  %v796 = vadd.f32 0.0, %v795
  %797 = vmatprep.mubr.bf16.mxu0 0
  %798 = vmatmul.mubr.bf16.gmra.mxu0 %v700
  %v799 = vpop.f32.mrf.mxu0
  %v800 = vadd.f32 0.0, %v799
  %v801 = vpop.f32.mrf.mxu0
  %v802 = vadd.f32 0.0, %v801
  %v803 = vpop.f32.mrf.mxu0
  %v804 = vadd.f32 0.0, %v803
  %v805 = vpop.f32.mrf.mxu0
  %v806 = vadd.f32 0.0, %v805
  %807 = vmatprep.mubr.bf16.mxu0 0
  %808 = vmatmul.mubr.bf16.gmra.mxu0 %v703
  %v809 = vpop.f32.mrf.mxu0
  %v810 = vadd.f32 0.0, %v809
  %v811 = vpop.f32.mrf.mxu0
  %v812 = vadd.f32 0.0, %v811
  %v813 = vpop.f32.mrf.mxu0
  %v814 = vadd.f32 0.0, %v813
  %v815 = vpop.f32.mrf.mxu0
  %v816 = vadd.f32 0.0, %v815
  %817 = vdwg.mxu0
  %v818 = vadd.f32 %v523, %v740
  %v819 = vadd.f32 %v525, %v742
  %v820 = vadd.f32 %v527, %v744
  %v821 = vadd.f32 %v529, %v746
  %v822 = vadd.f32 %v533, %v750
  %v823 = vadd.f32 %v535, %v752
  %v824 = vadd.f32 %v537, %v754
  %v825 = vadd.f32 %v539, %v756
  %v826 = vadd.f32 %v543, %v760
  %v827 = vadd.f32 %v545, %v762
  %v828 = vadd.f32 %v547, %v764
  %v829 = vadd.f32 %v549, %v766
  %v830 = vadd.f32 %v553, %v770
  %v831 = vadd.f32 %v555, %v772
  %v832 = vadd.f32 %v557, %v774
  %v833 = vadd.f32 %v559, %v776
  %v834 = vadd.f32 %v563, %v780
  %v835 = vadd.f32 %v565, %v782
  %v836 = vadd.f32 %v567, %v784
  %v837 = vadd.f32 %v569, %v786
  %v838 = vadd.f32 %v573, %v790
  %v839 = vadd.f32 %v575, %v792
  %v840 = vadd.f32 %v577, %v794
  %v841 = vadd.f32 %v579, %v796
  %v842 = vadd.f32 %v583, %v800
  %v843 = vadd.f32 %v585, %v802
  %v844 = vadd.f32 %v587, %v804
  %v845 = vadd.f32 %v589, %v806
  %v846 = vadd.f32 %v593, %v810
  %v847 = vadd.f32 %v595, %v812
  %v848 = vadd.f32 %v597, %v814
  %v849 = vadd.f32 %v599, %v816
  %v850 = vld [vmem:[%s5] sm:$0x3]
  %v852 = vlaneseq
  %v853 = vshrl.u32 %v852, 7
  %v854 = vsub.s32 0, %v853
  %v855 = vrot.slane %v850, %v854
  %v856 = vlaneseq
  %v857 = vshrl.u32 %v856, 7
  %v858 = vsub.s32 1, %v857
  %v859 = vrot.slane %v850, %v858
  %v862 = vadd.f32 %v818, %v855
  %v863 = vadd.f32 %v819, %v859
  %v864 = vadd.f32 %v820, %v855
  %v865 = vadd.f32 %v821, %v859
  %v866 = vadd.f32 %v822, %v855
  %v867 = vadd.f32 %v823, %v859
  %v868 = vadd.f32 %v824, %v855
  %v869 = vadd.f32 %v825, %v859
  %v870 = vadd.f32 %v826, %v855
  %v871 = vadd.f32 %v827, %v859
  %v872 = vadd.f32 %v828, %v855
  %v873 = vadd.f32 %v829, %v859
  %v874 = vadd.f32 %v830, %v855
  %v875 = vadd.f32 %v831, %v859
  %v876 = vadd.f32 %v832, %v855
  %v877 = vadd.f32 %v833, %v859
  %v878 = vadd.f32 %v834, %v855
  %v879 = vadd.f32 %v835, %v859
  %v880 = vadd.f32 %v836, %v855
  %v881 = vadd.f32 %v837, %v859
  %v882 = vadd.f32 %v838, %v855
  %v883 = vadd.f32 %v839, %v859
  %v884 = vadd.f32 %v840, %v855
  %v885 = vadd.f32 %v841, %v859
  %v886 = vadd.f32 %v842, %v855
  %v887 = vadd.f32 %v843, %v859
  %v888 = vadd.f32 %v844, %v855
  %v889 = vadd.f32 %v845, %v859
  %v890 = vadd.f32 %v846, %v855
  %v891 = vadd.f32 %v847, %v859
  %v892 = vadd.f32 %v848, %v855
  %v893 = vadd.f32 %v849, %v859
  %s894 = sld [smem:[#allocation2]]
  %s895 = sadd.s32 %s894, 843314857
  %s896 = smul.u32 0, 32768
  %s897 = sadd.s32 %s895, %s896
  %v898 = vlaneseq
  %v899 = vshrl.u32 %v898, 7
  %v900 = vadd.s32 %v899, 8
  %v901 = vadd.s32 %v899, 16
  %v902 = vadd.s32 %v899, 24
  %v903 = vadd.s32 %v899, 32
  %v904 = vadd.s32 %v899, 40
  %v905 = vadd.s32 %v899, 48
  %v906 = vadd.s32 %v899, 56
  %v907 = vadd.s32 %v899, 64
  %v908 = vadd.s32 %v899, 72
  %v909 = vadd.s32 %v899, 80
  %v910 = vadd.s32 %v899, 88
  %v911 = vadd.s32 %v899, 96
  %v912 = vadd.s32 %v899, 104
  %v913 = vadd.s32 %v899, 112
  %v914 = vadd.s32 %v899, 120
  %v915 = vlaneseq
  %v916 = vand.u32 %v915, 127
  %v917 = vadd.s32 %v916, 128
  %v918 = vmul.u32 %v899, 256
  %v919 = vmul.u32 %v900, 256
  %v920 = vmul.u32 %v901, 256
  %v921 = vmul.u32 %v902, 256
  %v922 = vmul.u32 %v903, 256
  %v923 = vmul.u32 %v904, 256
  %v924 = vmul.u32 %v905, 256
  %v925 = vmul.u32 %v906, 256
  %v926 = vmul.u32 %v907, 256
  %v927 = vmul.u32 %v908, 256
  %v928 = vmul.u32 %v909, 256
  %v929 = vmul.u32 %v910, 256
  %v930 = vmul.u32 %v911, 256
  %v931 = vmul.u32 %v912, 256
  %v932 = vmul.u32 %v913, 256
  %v933 = vmul.u32 %v914, 256
  %v934 = vadd.s32 %v918, %v916
  %v935 = vadd.s32 %v918, %v917
  %v936 = vadd.s32 %v919, %v916
  %v937 = vadd.s32 %v919, %v917
  %v938 = vadd.s32 %v920, %v916
  %v939 = vadd.s32 %v920, %v917
  %v940 = vadd.s32 %v921, %v916
  %v941 = vadd.s32 %v921, %v917
  %v942 = vadd.s32 %v922, %v916
  %v943 = vadd.s32 %v922, %v917
  %v944 = vadd.s32 %v923, %v916
  %v945 = vadd.s32 %v923, %v917
  %v946 = vadd.s32 %v924, %v916
  %v947 = vadd.s32 %v924, %v917
  %v948 = vadd.s32 %v925, %v916
  %v949 = vadd.s32 %v925, %v917
  %v950 = vadd.s32 %v926, %v916
  %v951 = vadd.s32 %v926, %v917
  %v952 = vadd.s32 %v927, %v916
  %v953 = vadd.s32 %v927, %v917
  %v954 = vadd.s32 %v928, %v916
  %v955 = vadd.s32 %v928, %v917
  %v956 = vadd.s32 %v929, %v916
  %v957 = vadd.s32 %v929, %v917
  %v958 = vadd.s32 %v930, %v916
  %v959 = vadd.s32 %v930, %v917
  %v960 = vadd.s32 %v931, %v916
  %v961 = vadd.s32 %v931, %v917
  %v962 = vadd.s32 %v932, %v916
  %v963 = vadd.s32 %v932, %v917
  %v964 = vadd.s32 %v933, %v916
  %v965 = vadd.s32 %v933, %v917
  %v966 = vmul.u32 %v934, 2654435761
  %v967 = vmul.u32 %v935, 2654435761
  %v968 = vmul.u32 %v936, 2654435761
  %v969 = vmul.u32 %v937, 2654435761
  %v970 = vmul.u32 %v938, 2654435761
  %v971 = vmul.u32 %v939, 2654435761
  %v972 = vmul.u32 %v940, 2654435761
  %v973 = vmul.u32 %v941, 2654435761
  %v974 = vmul.u32 %v942, 2654435761
  %v975 = vmul.u32 %v943, 2654435761
  %v976 = vmul.u32 %v944, 2654435761
  %v977 = vmul.u32 %v945, 2654435761
  %v978 = vmul.u32 %v946, 2654435761
  %v979 = vmul.u32 %v947, 2654435761
  %v980 = vmul.u32 %v948, 2654435761
  %v981 = vmul.u32 %v949, 2654435761
  %v982 = vmul.u32 %v950, 2654435761
  %v983 = vmul.u32 %v951, 2654435761
  %v984 = vmul.u32 %v952, 2654435761
  %v985 = vmul.u32 %v953, 2654435761
  %v986 = vmul.u32 %v954, 2654435761
  %v987 = vmul.u32 %v955, 2654435761
  %v988 = vmul.u32 %v956, 2654435761
  %v989 = vmul.u32 %v957, 2654435761
  %v990 = vmul.u32 %v958, 2654435761
  %v991 = vmul.u32 %v959, 2654435761
  %v992 = vmul.u32 %v960, 2654435761
  %v993 = vmul.u32 %v961, 2654435761
  %v994 = vmul.u32 %v962, 2654435761
  %v995 = vmul.u32 %v963, 2654435761
  %v996 = vmul.u32 %v964, 2654435761
  %v997 = vmul.u32 %v965, 2654435761
  %v998 = vstv %s897
  %v999 = vadd.s32 %v966, %v998
  %v1000 = vadd.s32 %v967, %v998
  %v1001 = vadd.s32 %v968, %v998
  %v1002 = vadd.s32 %v969, %v998
  %v1003 = vadd.s32 %v970, %v998
  %v1004 = vadd.s32 %v971, %v998
  %v1005 = vadd.s32 %v972, %v998
  %v1006 = vadd.s32 %v973, %v998
  %v1007 = vadd.s32 %v974, %v998
  %v1008 = vadd.s32 %v975, %v998
  %v1009 = vadd.s32 %v976, %v998
  %v1010 = vadd.s32 %v977, %v998
  %v1011 = vadd.s32 %v978, %v998
  %v1012 = vadd.s32 %v979, %v998
  %v1013 = vadd.s32 %v980, %v998
  %v1014 = vadd.s32 %v981, %v998
  %v1015 = vadd.s32 %v982, %v998
  %v1016 = vadd.s32 %v983, %v998
  %v1017 = vadd.s32 %v984, %v998
  %v1018 = vadd.s32 %v985, %v998
  %v1019 = vadd.s32 %v986, %v998
  %v1020 = vadd.s32 %v987, %v998
  %v1021 = vadd.s32 %v988, %v998
  %v1022 = vadd.s32 %v989, %v998
  %v1023 = vadd.s32 %v990, %v998
  %v1024 = vadd.s32 %v991, %v998
  %v1025 = vadd.s32 %v992, %v998
  %v1026 = vadd.s32 %v993, %v998
  %v1027 = vadd.s32 %v994, %v998
  %v1028 = vadd.s32 %v995, %v998
  %v1029 = vadd.s32 %v996, %v998
  %v1030 = vadd.s32 %v997, %v998
  %v1031 = vshrl.u32 %v999, 15
  %v1032 = vshrl.u32 %v1000, 15
  %v1033 = vshrl.u32 %v1001, 15
  %v1034 = vshrl.u32 %v1002, 15
  %v1035 = vshrl.u32 %v1003, 15
  %v1036 = vshrl.u32 %v1004, 15
  %v1037 = vshrl.u32 %v1005, 15
  %v1038 = vshrl.u32 %v1006, 15
  %v1039 = vshrl.u32 %v1007, 15
  %v1040 = vshrl.u32 %v1008, 15
  %v1041 = vshrl.u32 %v1009, 15
  %v1042 = vshrl.u32 %v1010, 15
  %v1043 = vshrl.u32 %v1011, 15
  %v1044 = vshrl.u32 %v1012, 15
  %v1045 = vshrl.u32 %v1013, 15
  %v1046 = vshrl.u32 %v1014, 15
  %v1047 = vshrl.u32 %v1015, 15
  %v1048 = vshrl.u32 %v1016, 15
  %v1049 = vshrl.u32 %v1017, 15
  %v1050 = vshrl.u32 %v1018, 15
  %v1051 = vshrl.u32 %v1019, 15
  %v1052 = vshrl.u32 %v1020, 15
  %v1053 = vshrl.u32 %v1021, 15
  %v1054 = vshrl.u32 %v1022, 15
  %v1055 = vshrl.u32 %v1023, 15
  %v1056 = vshrl.u32 %v1024, 15
  %v1057 = vshrl.u32 %v1025, 15
  %v1058 = vshrl.u32 %v1026, 15
  %v1059 = vshrl.u32 %v1027, 15
  %v1060 = vshrl.u32 %v1028, 15
  %v1061 = vshrl.u32 %v1029, 15
  %v1062 = vshrl.u32 %v1030, 15
  %v1063 = vxor.u32 %v999, %v1031
  %v1064 = vxor.u32 %v1000, %v1032
  %v1065 = vxor.u32 %v1001, %v1033
  %v1066 = vxor.u32 %v1002, %v1034
  %v1067 = vxor.u32 %v1003, %v1035
  %v1068 = vxor.u32 %v1004, %v1036
  %v1069 = vxor.u32 %v1005, %v1037
  %v1070 = vxor.u32 %v1006, %v1038
  %v1071 = vxor.u32 %v1007, %v1039
  %v1072 = vxor.u32 %v1008, %v1040
  %v1073 = vxor.u32 %v1009, %v1041
  %v1074 = vxor.u32 %v1010, %v1042
  %v1075 = vxor.u32 %v1011, %v1043
  %v1076 = vxor.u32 %v1012, %v1044
  %v1077 = vxor.u32 %v1013, %v1045
  %v1078 = vxor.u32 %v1014, %v1046
  %v1079 = vxor.u32 %v1015, %v1047
  %v1080 = vxor.u32 %v1016, %v1048
  %v1081 = vxor.u32 %v1017, %v1049
  %v1082 = vxor.u32 %v1018, %v1050
  %v1083 = vxor.u32 %v1019, %v1051
  %v1084 = vxor.u32 %v1020, %v1052
  %v1085 = vxor.u32 %v1021, %v1053
  %v1086 = vxor.u32 %v1022, %v1054
  %v1087 = vxor.u32 %v1023, %v1055
  %v1088 = vxor.u32 %v1024, %v1056
  %v1089 = vxor.u32 %v1025, %v1057
  %v1090 = vxor.u32 %v1026, %v1058
  %v1091 = vxor.u32 %v1027, %v1059
  %v1092 = vxor.u32 %v1028, %v1060
  %v1093 = vxor.u32 %v1029, %v1061
  %v1094 = vxor.u32 %v1030, %v1062
  %v1095 = vmul.u32 %v1063, 739982445
  %v1096 = vmul.u32 %v1064, 739982445
  %v1097 = vmul.u32 %v1065, 739982445
  %v1098 = vmul.u32 %v1066, 739982445
  %v1099 = vmul.u32 %v1067, 739982445
  %v1100 = vmul.u32 %v1068, 739982445
  %v1101 = vmul.u32 %v1069, 739982445
  %v1102 = vmul.u32 %v1070, 739982445
  %v1103 = vmul.u32 %v1071, 739982445
  %v1104 = vmul.u32 %v1072, 739982445
  %v1105 = vmul.u32 %v1073, 739982445
  %v1106 = vmul.u32 %v1074, 739982445
  %v1107 = vmul.u32 %v1075, 739982445
  %v1108 = vmul.u32 %v1076, 739982445
  %v1109 = vmul.u32 %v1077, 739982445
  %v1110 = vmul.u32 %v1078, 739982445
  %v1111 = vmul.u32 %v1079, 739982445
  %v1112 = vmul.u32 %v1080, 739982445
  %v1113 = vmul.u32 %v1081, 739982445
  %v1114 = vmul.u32 %v1082, 739982445
  %v1115 = vmul.u32 %v1083, 739982445
  %v1116 = vmul.u32 %v1084, 739982445
  %v1117 = vmul.u32 %v1085, 739982445
  %v1118 = vmul.u32 %v1086, 739982445
  %v1119 = vmul.u32 %v1087, 739982445
  %v1120 = vmul.u32 %v1088, 739982445
  %v1121 = vmul.u32 %v1089, 739982445
  %v1122 = vmul.u32 %v1090, 739982445
  %v1123 = vmul.u32 %v1091, 739982445
  %v1124 = vmul.u32 %v1092, 739982445
  %v1125 = vmul.u32 %v1093, 739982445
  %v1126 = vmul.u32 %v1094, 739982445
  %vm1127 = vcmp.lt.u32.totalorder %v1095, 2147483648
  %vm1128 = vcmp.lt.u32.totalorder %v1096, 2147483648
  %vm1129 = vcmp.lt.u32.totalorder %v1097, 2147483648
  %vm1130 = vcmp.lt.u32.totalorder %v1098, 2147483648
  %vm1131 = vcmp.lt.u32.totalorder %v1099, 2147483648
  %vm1132 = vcmp.lt.u32.totalorder %v1100, 2147483648
  %vm1133 = vcmp.lt.u32.totalorder %v1101, 2147483648
  %vm1134 = vcmp.lt.u32.totalorder %v1102, 2147483648
  %vm1135 = vcmp.lt.u32.totalorder %v1103, 2147483648
  %vm1136 = vcmp.lt.u32.totalorder %v1104, 2147483648
  %vm1137 = vcmp.lt.u32.totalorder %v1105, 2147483648
  %vm1138 = vcmp.lt.u32.totalorder %v1106, 2147483648
  %vm1139 = vcmp.lt.u32.totalorder %v1107, 2147483648
  %vm1140 = vcmp.lt.u32.totalorder %v1108, 2147483648
  %vm1141 = vcmp.lt.u32.totalorder %v1109, 2147483648
  %vm1142 = vcmp.lt.u32.totalorder %v1110, 2147483648
  %vm1143 = vcmp.lt.u32.totalorder %v1111, 2147483648
  %vm1144 = vcmp.lt.u32.totalorder %v1112, 2147483648
  %vm1145 = vcmp.lt.u32.totalorder %v1113, 2147483648
  %vm1146 = vcmp.lt.u32.totalorder %v1114, 2147483648
  %vm1147 = vcmp.lt.u32.totalorder %v1115, 2147483648
  %vm1148 = vcmp.lt.u32.totalorder %v1116, 2147483648
  %vm1149 = vcmp.lt.u32.totalorder %v1117, 2147483648
  %vm1150 = vcmp.lt.u32.totalorder %v1118, 2147483648
  %vm1151 = vcmp.lt.u32.totalorder %v1119, 2147483648
  %vm1152 = vcmp.lt.u32.totalorder %v1120, 2147483648
  %vm1153 = vcmp.lt.u32.totalorder %v1121, 2147483648
  %vm1154 = vcmp.lt.u32.totalorder %v1122, 2147483648
  %vm1155 = vcmp.lt.u32.totalorder %v1123, 2147483648
  %vm1156 = vcmp.lt.u32.totalorder %v1124, 2147483648
  %vm1157 = vcmp.lt.u32.totalorder %v1125, 2147483648
  %vm1158 = vcmp.lt.u32.totalorder %v1126, 2147483648
  %v1159 = vmax.f32 %v862, 0.0
  %v1160 = vmax.f32 %v863, 0.0
  %v1161 = vmax.f32 %v864, 0.0
  %v1162 = vmax.f32 %v865, 0.0
  %v1163 = vmax.f32 %v866, 0.0
  %v1164 = vmax.f32 %v867, 0.0
  %v1165 = vmax.f32 %v868, 0.0
  %v1166 = vmax.f32 %v869, 0.0
  %v1167 = vmax.f32 %v870, 0.0
  %v1168 = vmax.f32 %v871, 0.0
  %v1169 = vmax.f32 %v872, 0.0
  %v1170 = vmax.f32 %v873, 0.0
  %v1171 = vmax.f32 %v874, 0.0
  %v1172 = vmax.f32 %v875, 0.0
  %v1173 = vmax.f32 %v876, 0.0
  %v1174 = vmax.f32 %v877, 0.0
  %v1175 = vmax.f32 %v878, 0.0
  %v1176 = vmax.f32 %v879, 0.0
  %v1177 = vmax.f32 %v880, 0.0
  %v1178 = vmax.f32 %v881, 0.0
  %v1179 = vmax.f32 %v882, 0.0
  %v1180 = vmax.f32 %v883, 0.0
  %v1181 = vmax.f32 %v884, 0.0
  %v1182 = vmax.f32 %v885, 0.0
  %v1183 = vmax.f32 %v886, 0.0
  %v1184 = vmax.f32 %v887, 0.0
  %v1185 = vmax.f32 %v888, 0.0
  %v1186 = vmax.f32 %v889, 0.0
  %v1187 = vmax.f32 %v890, 0.0
  %v1188 = vmax.f32 %v891, 0.0
  %v1189 = vmax.f32 %v892, 0.0
  %v1190 = vmax.f32 %v893, 0.0
  %v1191 = vmul.f32 %v1159, 2.0
  %v1192 = vmul.f32 %v1160, 2.0
  %v1193 = vmul.f32 %v1161, 2.0
  %v1194 = vmul.f32 %v1162, 2.0
  %v1195 = vmul.f32 %v1163, 2.0
  %v1196 = vmul.f32 %v1164, 2.0
  %v1197 = vmul.f32 %v1165, 2.0
  %v1198 = vmul.f32 %v1166, 2.0
  %v1199 = vmul.f32 %v1167, 2.0
  %v1200 = vmul.f32 %v1168, 2.0
  %v1201 = vmul.f32 %v1169, 2.0
  %v1202 = vmul.f32 %v1170, 2.0
  %v1203 = vmul.f32 %v1171, 2.0
  %v1204 = vmul.f32 %v1172, 2.0
  %v1205 = vmul.f32 %v1173, 2.0
  %v1206 = vmul.f32 %v1174, 2.0
  %v1207 = vmul.f32 %v1175, 2.0
  %v1208 = vmul.f32 %v1176, 2.0
  %v1209 = vmul.f32 %v1177, 2.0
  %v1210 = vmul.f32 %v1178, 2.0
  %v1211 = vmul.f32 %v1179, 2.0
  %v1212 = vmul.f32 %v1180, 2.0
  %v1213 = vmul.f32 %v1181, 2.0
  %v1214 = vmul.f32 %v1182, 2.0
  %v1215 = vmul.f32 %v1183, 2.0
  %v1216 = vmul.f32 %v1184, 2.0
  %v1217 = vmul.f32 %v1185, 2.0
  %v1218 = vmul.f32 %v1186, 2.0
  %v1219 = vmul.f32 %v1187, 2.0
  %v1220 = vmul.f32 %v1188, 2.0
  %v1221 = vmul.f32 %v1189, 2.0
  %v1222 = vmul.f32 %v1190, 2.0
  %v1223 = vsel %vm1127, %v1191, 0.0
  %v1224 = vsel %vm1128, %v1192, 0.0
  %v1225 = vsel %vm1129, %v1193, 0.0
  %v1226 = vsel %vm1130, %v1194, 0.0
  %v1227 = vsel %vm1131, %v1195, 0.0
  %v1228 = vsel %vm1132, %v1196, 0.0
  %v1229 = vsel %vm1133, %v1197, 0.0
  %v1230 = vsel %vm1134, %v1198, 0.0
  %v1231 = vsel %vm1135, %v1199, 0.0
  %v1232 = vsel %vm1136, %v1200, 0.0
  %v1233 = vsel %vm1137, %v1201, 0.0
  %v1234 = vsel %vm1138, %v1202, 0.0
  %v1235 = vsel %vm1139, %v1203, 0.0
  %v1236 = vsel %vm1140, %v1204, 0.0
  %v1237 = vsel %vm1141, %v1205, 0.0
  %v1238 = vsel %vm1142, %v1206, 0.0
  %v1239 = vsel %vm1143, %v1207, 0.0
  %v1240 = vsel %vm1144, %v1208, 0.0
  %v1241 = vsel %vm1145, %v1209, 0.0
  %v1242 = vsel %vm1146, %v1210, 0.0
  %v1243 = vsel %vm1147, %v1211, 0.0
  %v1244 = vsel %vm1148, %v1212, 0.0
  %v1245 = vsel %vm1149, %v1213, 0.0
  %v1246 = vsel %vm1150, %v1214, 0.0
  %v1247 = vsel %vm1151, %v1215, 0.0
  %v1248 = vsel %vm1152, %v1216, 0.0
  %v1249 = vsel %vm1153, %v1217, 0.0
  %v1250 = vsel %vm1154, %v1218, 0.0
  %v1251 = vsel %vm1155, %v1219, 0.0
  %v1252 = vsel %vm1156, %v1220, 0.0
  %v1253 = vsel %vm1157, %v1221, 0.0
  %v1254 = vsel %vm1158, %v1222, 0.0
  %v1255 = vpack.c.bf16 %v1225, %v1223
  %v1256 = vpack.c.bf16 %v1226, %v1224
  %v1257 = vpack.c.bf16 %v1229, %v1227
  %v1258 = vpack.c.bf16 %v1230, %v1228
  %v1259 = vpack.c.bf16 %v1233, %v1231
  %v1260 = vpack.c.bf16 %v1234, %v1232
  %v1261 = vpack.c.bf16 %v1237, %v1235
  %v1262 = vpack.c.bf16 %v1238, %v1236
  %v1263 = vpack.c.bf16 %v1241, %v1239
  %v1264 = vpack.c.bf16 %v1242, %v1240
  %v1265 = vpack.c.bf16 %v1245, %v1243
  %v1266 = vpack.c.bf16 %v1246, %v1244
  %v1267 = vpack.c.bf16 %v1249, %v1247
  %v1268 = vpack.c.bf16 %v1250, %v1248
  %v1269 = vpack.c.bf16 %v1253, %v1251
  %v1270 = vpack.c.bf16 %v1254, %v1252
  %v1271 = vld [vmem:[%s6] sm:$0xf]
  %v1272 = vld [vmem:[%s6 + $0x4] sm:$0xf]
  %v1273 = vld [vmem:[%s6 + $0x8] sm:$0xf]
  %v1274 = vld [vmem:[%s6 + $0xc] sm:$0xf]
  %v1275 = vld [vmem:[%s6 + $0x10] sm:$0xf]
  %v1276 = vld [vmem:[%s6 + $0x14] sm:$0xf]
  %v1277 = vld [vmem:[%s6 + $0x18] sm:$0xf]
  %v1278 = vld [vmem:[%s6 + $0x1c] sm:$0xf]
  %v1279 = vld [vmem:[%s6 + $0x20] sm:$0xf]
  %v1280 = vld [vmem:[%s6 + $0x24] sm:$0xf]
  %v1281 = vld [vmem:[%s6 + $0x28] sm:$0xf]
  %v1282 = vld [vmem:[%s6 + $0x2c] sm:$0xf]
  %v1283 = vld [vmem:[%s6 + $0x30] sm:$0xf]
  %v1284 = vld [vmem:[%s6 + $0x34] sm:$0xf]
  %v1285 = vld [vmem:[%s6 + $0x38] sm:$0xf]
  %v1286 = vld [vmem:[%s6 + $0x3c] sm:$0xf]
  %v1287 = vld [vmem:[%s6 + $0x40] sm:$0xf]
  %v1288 = vld [vmem:[%s6 + $0x44] sm:$0xf]
  %v1289 = vld [vmem:[%s6 + $0x48] sm:$0xf]
  %v1290 = vld [vmem:[%s6 + $0x4c] sm:$0xf]
  %v1291 = vld [vmem:[%s6 + $0x50] sm:$0xf]
  %v1292 = vld [vmem:[%s6 + $0x54] sm:$0xf]
  %v1293 = vld [vmem:[%s6 + $0x58] sm:$0xf]
  %v1294 = vld [vmem:[%s6 + $0x5c] sm:$0xf]
  %v1295 = vld [vmem:[%s6 + $0x60] sm:$0xf]
  %v1296 = vld [vmem:[%s6 + $0x64] sm:$0xf]
  %v1297 = vld [vmem:[%s6 + $0x68] sm:$0xf]
  %v1298 = vld [vmem:[%s6 + $0x6c] sm:$0xf]
  %v1299 = vld [vmem:[%s6 + $0x70] sm:$0xf]
  %v1300 = vld [vmem:[%s6 + $0x74] sm:$0xf]
  %v1301 = vld [vmem:[%s6 + $0x78] sm:$0xf]
  %v1302 = vld [vmem:[%s6 + $0x7c] sm:$0xf]
  %v1303 = vld [vmem:[%s7] sm:$0x1]
  %v1305 = vlaneseq
  %v1306 = vshrl.u32 %v1305, 7
  %v1307 = vsub.s32 0, %v1306
  %v1308 = vrot.slane %v1303, %v1307
  %v1342 = vunpack.c.l.b16 %v1271
  %v1343 = vunpack.c.l.b16 %v1272
  %v1344 = vunpack.c.l.b16 %v1273
  %v1345 = vunpack.c.l.b16 %v1274
  %v1346 = vunpack.c.l.b16 %v1275
  %v1347 = vunpack.c.l.b16 %v1276
  %v1348 = vunpack.c.l.b16 %v1277
  %v1349 = vunpack.c.l.b16 %v1278
  %v1350 = vunpack.c.l.b16 %v1279
  %v1351 = vunpack.c.l.b16 %v1280
  %v1352 = vunpack.c.l.b16 %v1281
  %v1353 = vunpack.c.l.b16 %v1282
  %v1354 = vunpack.c.l.b16 %v1283
  %v1355 = vunpack.c.l.b16 %v1284
  %v1356 = vunpack.c.l.b16 %v1285
  %v1357 = vunpack.c.l.b16 %v1286
  %v1358 = vunpack.c.l.b16 %v1287
  %v1359 = vunpack.c.l.b16 %v1288
  %v1360 = vunpack.c.l.b16 %v1289
  %v1361 = vunpack.c.l.b16 %v1290
  %v1362 = vunpack.c.l.b16 %v1291
  %v1363 = vunpack.c.l.b16 %v1292
  %v1364 = vunpack.c.l.b16 %v1293
  %v1365 = vunpack.c.l.b16 %v1294
  %v1366 = vunpack.c.l.b16 %v1295
  %v1367 = vunpack.c.l.b16 %v1296
  %v1368 = vunpack.c.l.b16 %v1297
  %v1369 = vunpack.c.l.b16 %v1298
  %v1370 = vunpack.c.l.b16 %v1299
  %v1371 = vunpack.c.l.b16 %v1300
  %v1372 = vunpack.c.l.b16 %v1301
  %v1373 = vunpack.c.l.b16 %v1302
  %v1374 = vpack.c.b16 %v1343, %v1342
  %v1375 = vpack.c.b16 %v1345, %v1344
  %v1376 = vpack.c.b16 %v1347, %v1346
  %v1377 = vpack.c.b16 %v1349, %v1348
  %v1378 = vpack.c.b16 %v1351, %v1350
  %v1379 = vpack.c.b16 %v1353, %v1352
  %v1380 = vpack.c.b16 %v1355, %v1354
  %v1381 = vpack.c.b16 %v1357, %v1356
  %v1382 = vpack.c.b16 %v1359, %v1358
  %v1383 = vpack.c.b16 %v1361, %v1360
  %v1384 = vpack.c.b16 %v1363, %v1362
  %v1385 = vpack.c.b16 %v1365, %v1364
  %v1386 = vpack.c.b16 %v1367, %v1366
  %v1387 = vpack.c.b16 %v1369, %v1368
  %v1388 = vpack.c.b16 %v1371, %v1370
  %v1389 = vpack.c.b16 %v1373, %v1372
  %1406 = vmatprep.subr.bf16.mxu0 0
  %1407 = vmatpush1.bf16.msra.mxu0 %v1381
  %1408 = vmatprep.subr.bf16.mxu0 0
  %1409 = vmatpush1.bf16.msra.mxu0 %v1380
  %1410 = vmatprep.subr.bf16.mxu0 0
  %1411 = vmatpush1.bf16.msra.mxu0 %v1379
  %1412 = vmatprep.subr.bf16.mxu0 0
  %1413 = vmatpush1.bf16.msra.mxu0 %v1378
  %1414 = vmatprep.subr.bf16.mxu0 0
  %1415 = vmatpush1.bf16.msra.mxu0 %v1377
  %1416 = vmatprep.subr.bf16.mxu0 0
  %1417 = vmatpush1.bf16.msra.mxu0 %v1376
  %1418 = vmatprep.subr.bf16.mxu0 0
  %1419 = vmatpush1.bf16.msra.mxu0 %v1375
  %1420 = vmatprep.subr.bf16.mxu0 0
  %1421 = vmatpush1.bf16.msra.mxu0 %v1374
  %1422 = vmatprep.subr.bf16.mxu0 0
  %1423 = vmatpush2.bf16.msra.mxu0 %v1389
  %1424 = vmatprep.subr.bf16.mxu0 0
  %1425 = vmatpush2.bf16.msra.mxu0 %v1388
  %1426 = vmatprep.subr.bf16.mxu0 0
  %1427 = vmatpush2.bf16.msra.mxu0 %v1387
  %1428 = vmatprep.subr.bf16.mxu0 0
  %1429 = vmatpush2.bf16.msra.mxu0 %v1386
  %1430 = vmatprep.subr.bf16.mxu0 0
  %1431 = vmatpush2.bf16.msra.mxu0 %v1385
  %1432 = vmatprep.subr.bf16.mxu0 0
  %1433 = vmatpush2.bf16.msra.mxu0 %v1384
  %1434 = vmatprep.subr.bf16.mxu0 0
  %1435 = vmatpush2.bf16.msra.mxu0 %v1383
  %1436 = vmatprep.subr.bf16.mxu0 0
  %1437 = vmatpush2.bf16.msra.mxu0 %v1382
  %1438 = vmatprep.mubr.bf16.mxu0 %v1256
  %1439 = vmatmul.mubr.bf16.gmra.mxu0 %v1255
  %v1440 = vpop.f32.mrf.mxu0
  %v1441 = vadd.f32 %v1308, %v1440
  %v1442 = vpop.f32.mrf.mxu0
  %v1443 = vpop.f32.mrf.mxu0
  %v1444 = vadd.f32 %v1308, %v1443
  %v1445 = vpop.f32.mrf.mxu0
  %1446 = vmatprep.mubr.bf16.mxu0 %v1258
  %1447 = vmatmul.mubr.bf16.gmra.mxu0 %v1257
  %v1448 = vpop.f32.mrf.mxu0
  %v1449 = vadd.f32 %v1308, %v1448
  %v1450 = vpop.f32.mrf.mxu0
  %v1451 = vpop.f32.mrf.mxu0
  %v1452 = vadd.f32 %v1308, %v1451
  %v1453 = vpop.f32.mrf.mxu0
  %1454 = vmatprep.mubr.bf16.mxu0 %v1260
  %1455 = vmatmul.mubr.bf16.gmra.mxu0 %v1259
  %v1456 = vpop.f32.mrf.mxu0
  %v1457 = vadd.f32 %v1308, %v1456
  %v1458 = vpop.f32.mrf.mxu0
  %v1459 = vpop.f32.mrf.mxu0
  %v1460 = vadd.f32 %v1308, %v1459
  %v1461 = vpop.f32.mrf.mxu0
  %1462 = vmatprep.mubr.bf16.mxu0 %v1262
  %1463 = vmatmul.mubr.bf16.gmra.mxu0 %v1261
  %v1464 = vpop.f32.mrf.mxu0
  %v1465 = vadd.f32 %v1308, %v1464
  %v1466 = vpop.f32.mrf.mxu0
  %v1467 = vpop.f32.mrf.mxu0
  %v1468 = vadd.f32 %v1308, %v1467
  %v1469 = vpop.f32.mrf.mxu0
  %1470 = vmatprep.mubr.bf16.mxu0 %v1264
  %1471 = vmatmul.mubr.bf16.gmra.mxu0 %v1263
  %v1472 = vpop.f32.mrf.mxu0
  %v1473 = vadd.f32 %v1308, %v1472
  %v1474 = vpop.f32.mrf.mxu0
  %v1475 = vpop.f32.mrf.mxu0
  %v1476 = vadd.f32 %v1308, %v1475
  %v1477 = vpop.f32.mrf.mxu0
  %1478 = vmatprep.mubr.bf16.mxu0 %v1266
  %1479 = vmatmul.mubr.bf16.gmra.mxu0 %v1265
  %v1480 = vpop.f32.mrf.mxu0
  %v1481 = vadd.f32 %v1308, %v1480
  %v1482 = vpop.f32.mrf.mxu0
  %v1483 = vpop.f32.mrf.mxu0
  %v1484 = vadd.f32 %v1308, %v1483
  %v1485 = vpop.f32.mrf.mxu0
  %1486 = vmatprep.mubr.bf16.mxu0 %v1268
  %1487 = vmatmul.mubr.bf16.gmra.mxu0 %v1267
  %v1488 = vpop.f32.mrf.mxu0
  %v1489 = vadd.f32 %v1308, %v1488
  %v1490 = vpop.f32.mrf.mxu0
  %v1491 = vpop.f32.mrf.mxu0
  %v1492 = vadd.f32 %v1308, %v1491
  %v1493 = vpop.f32.mrf.mxu0
  %1494 = vmatprep.mubr.bf16.mxu0 %v1270
  %1495 = vmatmul.mubr.bf16.gmra.mxu0 %v1269
  %v1496 = vpop.f32.mrf.mxu0
  %v1497 = vadd.f32 %v1308, %v1496
  %v1498 = vpop.f32.mrf.mxu0
  %v1499 = vpop.f32.mrf.mxu0
  %v1500 = vadd.f32 %v1308, %v1499
  %v1501 = vpop.f32.mrf.mxu0
  %1502 = vdwg.mxu0
  %s1503 = sadd.s32 %s894, 2135587861
  %s1504 = smul.u32 0, 16384
  %s1505 = sadd.s32 %s1503, %s1504
  %v1506 = vmul.u32 %v899, 128
  %v1507 = vmul.u32 %v900, 128
  %v1508 = vmul.u32 %v901, 128
  %v1509 = vmul.u32 %v902, 128
  %v1510 = vmul.u32 %v903, 128
  %v1511 = vmul.u32 %v904, 128
  %v1512 = vmul.u32 %v905, 128
  %v1513 = vmul.u32 %v906, 128
  %v1514 = vmul.u32 %v907, 128
  %v1515 = vmul.u32 %v908, 128
  %v1516 = vmul.u32 %v909, 128
  %v1517 = vmul.u32 %v910, 128
  %v1518 = vmul.u32 %v911, 128
  %v1519 = vmul.u32 %v912, 128
  %v1520 = vmul.u32 %v913, 128
  %v1521 = vmul.u32 %v914, 128
  %v1522 = vadd.s32 %v1506, %v916
  %v1523 = vadd.s32 %v1507, %v916
  %v1524 = vadd.s32 %v1508, %v916
  %v1525 = vadd.s32 %v1509, %v916
  %v1526 = vadd.s32 %v1510, %v916
  %v1527 = vadd.s32 %v1511, %v916
  %v1528 = vadd.s32 %v1512, %v916
  %v1529 = vadd.s32 %v1513, %v916
  %v1530 = vadd.s32 %v1514, %v916
  %v1531 = vadd.s32 %v1515, %v916
  %v1532 = vadd.s32 %v1516, %v916
  %v1533 = vadd.s32 %v1517, %v916
  %v1534 = vadd.s32 %v1518, %v916
  %v1535 = vadd.s32 %v1519, %v916
  %v1536 = vadd.s32 %v1520, %v916
  %v1537 = vadd.s32 %v1521, %v916
  %v1538 = vmul.u32 %v1522, 2654435761
  %v1539 = vmul.u32 %v1523, 2654435761
  %v1540 = vmul.u32 %v1524, 2654435761
  %v1541 = vmul.u32 %v1525, 2654435761
  %v1542 = vmul.u32 %v1526, 2654435761
  %v1543 = vmul.u32 %v1527, 2654435761
  %v1544 = vmul.u32 %v1528, 2654435761
  %v1545 = vmul.u32 %v1529, 2654435761
  %v1546 = vmul.u32 %v1530, 2654435761
  %v1547 = vmul.u32 %v1531, 2654435761
  %v1548 = vmul.u32 %v1532, 2654435761
  %v1549 = vmul.u32 %v1533, 2654435761
  %v1550 = vmul.u32 %v1534, 2654435761
  %v1551 = vmul.u32 %v1535, 2654435761
  %v1552 = vmul.u32 %v1536, 2654435761
  %v1553 = vmul.u32 %v1537, 2654435761
  %v1554 = vstv %s1505
  %v1555 = vadd.s32 %v1538, %v1554
  %v1556 = vadd.s32 %v1539, %v1554
  %v1557 = vadd.s32 %v1540, %v1554
  %v1558 = vadd.s32 %v1541, %v1554
  %v1559 = vadd.s32 %v1542, %v1554
  %v1560 = vadd.s32 %v1543, %v1554
  %v1561 = vadd.s32 %v1544, %v1554
  %v1562 = vadd.s32 %v1545, %v1554
  %v1563 = vadd.s32 %v1546, %v1554
  %v1564 = vadd.s32 %v1547, %v1554
  %v1565 = vadd.s32 %v1548, %v1554
  %v1566 = vadd.s32 %v1549, %v1554
  %v1567 = vadd.s32 %v1550, %v1554
  %v1568 = vadd.s32 %v1551, %v1554
  %v1569 = vadd.s32 %v1552, %v1554
  %v1570 = vadd.s32 %v1553, %v1554
  %v1571 = vshrl.u32 %v1555, 15
  %v1572 = vshrl.u32 %v1556, 15
  %v1573 = vshrl.u32 %v1557, 15
  %v1574 = vshrl.u32 %v1558, 15
  %v1575 = vshrl.u32 %v1559, 15
  %v1576 = vshrl.u32 %v1560, 15
  %v1577 = vshrl.u32 %v1561, 15
  %v1578 = vshrl.u32 %v1562, 15
  %v1579 = vshrl.u32 %v1563, 15
  %v1580 = vshrl.u32 %v1564, 15
  %v1581 = vshrl.u32 %v1565, 15
  %v1582 = vshrl.u32 %v1566, 15
  %v1583 = vshrl.u32 %v1567, 15
  %v1584 = vshrl.u32 %v1568, 15
  %v1585 = vshrl.u32 %v1569, 15
  %v1586 = vshrl.u32 %v1570, 15
  %v1587 = vxor.u32 %v1555, %v1571
  %v1588 = vxor.u32 %v1556, %v1572
  %v1589 = vxor.u32 %v1557, %v1573
  %v1590 = vxor.u32 %v1558, %v1574
  %v1591 = vxor.u32 %v1559, %v1575
  %v1592 = vxor.u32 %v1560, %v1576
  %v1593 = vxor.u32 %v1561, %v1577
  %v1594 = vxor.u32 %v1562, %v1578
  %v1595 = vxor.u32 %v1563, %v1579
  %v1596 = vxor.u32 %v1564, %v1580
  %v1597 = vxor.u32 %v1565, %v1581
  %v1598 = vxor.u32 %v1566, %v1582
  %v1599 = vxor.u32 %v1567, %v1583
  %v1600 = vxor.u32 %v1568, %v1584
  %v1601 = vxor.u32 %v1569, %v1585
  %v1602 = vxor.u32 %v1570, %v1586
  %v1603 = vmul.u32 %v1587, 739982445
  %v1604 = vmul.u32 %v1588, 739982445
  %v1605 = vmul.u32 %v1589, 739982445
  %v1606 = vmul.u32 %v1590, 739982445
  %v1607 = vmul.u32 %v1591, 739982445
  %v1608 = vmul.u32 %v1592, 739982445
  %v1609 = vmul.u32 %v1593, 739982445
  %v1610 = vmul.u32 %v1594, 739982445
  %v1611 = vmul.u32 %v1595, 739982445
  %v1612 = vmul.u32 %v1596, 739982445
  %v1613 = vmul.u32 %v1597, 739982445
  %v1614 = vmul.u32 %v1598, 739982445
  %v1615 = vmul.u32 %v1599, 739982445
  %v1616 = vmul.u32 %v1600, 739982445
  %v1617 = vmul.u32 %v1601, 739982445
  %v1618 = vmul.u32 %v1602, 739982445
  %vm1619 = vcmp.lt.u32.totalorder %v1603, 2147483648
  %vm1620 = vcmp.lt.u32.totalorder %v1604, 2147483648
  %vm1621 = vcmp.lt.u32.totalorder %v1605, 2147483648
  %vm1622 = vcmp.lt.u32.totalorder %v1606, 2147483648
  %vm1623 = vcmp.lt.u32.totalorder %v1607, 2147483648
  %vm1624 = vcmp.lt.u32.totalorder %v1608, 2147483648
  %vm1625 = vcmp.lt.u32.totalorder %v1609, 2147483648
  %vm1626 = vcmp.lt.u32.totalorder %v1610, 2147483648
  %vm1627 = vcmp.lt.u32.totalorder %v1611, 2147483648
  %vm1628 = vcmp.lt.u32.totalorder %v1612, 2147483648
  %vm1629 = vcmp.lt.u32.totalorder %v1613, 2147483648
  %vm1630 = vcmp.lt.u32.totalorder %v1614, 2147483648
  %vm1631 = vcmp.lt.u32.totalorder %v1615, 2147483648
  %vm1632 = vcmp.lt.u32.totalorder %v1616, 2147483648
  %vm1633 = vcmp.lt.u32.totalorder %v1617, 2147483648
  %vm1634 = vcmp.lt.u32.totalorder %v1618, 2147483648
  %v1635 = vmax.f32 %v1441, 0.0
  %v1636 = vmax.f32 %v1444, 0.0
  %v1637 = vmax.f32 %v1449, 0.0
  %v1638 = vmax.f32 %v1452, 0.0
  %v1639 = vmax.f32 %v1457, 0.0
  %v1640 = vmax.f32 %v1460, 0.0
  %v1641 = vmax.f32 %v1465, 0.0
  %v1642 = vmax.f32 %v1468, 0.0
  %v1643 = vmax.f32 %v1473, 0.0
  %v1644 = vmax.f32 %v1476, 0.0
  %v1645 = vmax.f32 %v1481, 0.0
  %v1646 = vmax.f32 %v1484, 0.0
  %v1647 = vmax.f32 %v1489, 0.0
  %v1648 = vmax.f32 %v1492, 0.0
  %v1649 = vmax.f32 %v1497, 0.0
  %v1650 = vmax.f32 %v1500, 0.0
  %v1651 = vmul.f32 %v1635, 2.0
  %v1652 = vmul.f32 %v1636, 2.0
  %v1653 = vmul.f32 %v1637, 2.0
  %v1654 = vmul.f32 %v1638, 2.0
  %v1655 = vmul.f32 %v1639, 2.0
  %v1656 = vmul.f32 %v1640, 2.0
  %v1657 = vmul.f32 %v1641, 2.0
  %v1658 = vmul.f32 %v1642, 2.0
  %v1659 = vmul.f32 %v1643, 2.0
  %v1660 = vmul.f32 %v1644, 2.0
  %v1661 = vmul.f32 %v1645, 2.0
  %v1662 = vmul.f32 %v1646, 2.0
  %v1663 = vmul.f32 %v1647, 2.0
  %v1664 = vmul.f32 %v1648, 2.0
  %v1665 = vmul.f32 %v1649, 2.0
  %v1666 = vmul.f32 %v1650, 2.0
  %v1667 = vsel %vm1619, %v1651, 0.0
  %v1668 = vsel %vm1620, %v1652, 0.0
  %v1669 = vsel %vm1621, %v1653, 0.0
  %v1670 = vsel %vm1622, %v1654, 0.0
  %v1671 = vsel %vm1623, %v1655, 0.0
  %v1672 = vsel %vm1624, %v1656, 0.0
  %v1673 = vsel %vm1625, %v1657, 0.0
  %v1674 = vsel %vm1626, %v1658, 0.0
  %v1675 = vsel %vm1627, %v1659, 0.0
  %v1676 = vsel %vm1628, %v1660, 0.0
  %v1677 = vsel %vm1629, %v1661, 0.0
  %v1678 = vsel %vm1630, %v1662, 0.0
  %v1679 = vsel %vm1631, %v1663, 0.0
  %v1680 = vsel %vm1632, %v1664, 0.0
  %v1681 = vsel %vm1633, %v1665, 0.0
  %v1682 = vsel %vm1634, %v1666, 0.0
  %v1683 = vld [vmem:[%s8] sm:$0x1]
  %v1685 = vlaneseq
  %v1686 = vshrl.u32 %v1685, 7
  %v1687 = vsub.s32 0, %v1686
  %v1688 = vrot.slane %v1683, %v1687
  %v1690 = vmul.f32 %v1667, %v1688
  %v1691 = vmul.f32 %v1668, %v1688
  %v1692 = vmul.f32 %v1669, %v1688
  %v1693 = vmul.f32 %v1670, %v1688
  %v1694 = vmul.f32 %v1671, %v1688
  %v1695 = vmul.f32 %v1672, %v1688
  %v1696 = vmul.f32 %v1673, %v1688
  %v1697 = vmul.f32 %v1674, %v1688
  %v1698 = vmul.f32 %v1675, %v1688
  %v1699 = vmul.f32 %v1676, %v1688
  %v1700 = vmul.f32 %v1677, %v1688
  %v1701 = vmul.f32 %v1678, %v1688
  %v1702 = vmul.f32 %v1679, %v1688
  %v1703 = vmul.f32 %v1680, %v1688
  %v1704 = vmul.f32 %v1681, %v1688
  %v1705 = vmul.f32 %v1682, %v1688
  %1706 = vxpose.xlu0.b32.start [1/16] %v1690, 128
  %1707 = vxpose.xlu0.b32.cont [2/16] %v1691, 128
  %1708 = vxpose.xlu0.b32.cont [3/16] %v1692, 128
  %1709 = vxpose.xlu0.b32.cont [4/16] %v1693, 128
  %1710 = vxpose.xlu0.b32.cont [5/16] %v1694, 128
  %1711 = vxpose.xlu0.b32.cont [6/16] %v1695, 128
  %1712 = vxpose.xlu0.b32.cont [7/16] %v1696, 128
  %1713 = vxpose.xlu0.b32.cont [8/16] %v1697, 128
  %1714 = vxpose.xlu0.b32.cont [9/16] %v1698, 128
  %1715 = vxpose.xlu0.b32.cont [10/16] %v1699, 128
  %1716 = vxpose.xlu0.b32.cont [11/16] %v1700, 128
  %1717 = vxpose.xlu0.b32.cont [12/16] %v1701, 128
  %1718 = vxpose.xlu0.b32.cont [13/16] %v1702, 128
  %1719 = vxpose.xlu0.b32.cont [14/16] %v1703, 128
  %1720 = vxpose.xlu0.b32.cont [15/16] %v1704, 128
  %1721 = vxpose.xlu0.b32.end [16/16] %v1705, 128
  %v1722 = vpop.trf.xlu0
  %v1723 = vpop.trf.xlu0
  %v1724 = vpop.trf.xlu0
  %v1725 = vpop.trf.xlu0
  %v1726 = vpop.trf.xlu0
  %v1727 = vpop.trf.xlu0
  %v1728 = vpop.trf.xlu0
  %v1729 = vpop.trf.xlu0
  %v1730 = vpop.trf.xlu0
  %v1731 = vpop.trf.xlu0
  %v1732 = vpop.trf.xlu0
  %v1733 = vpop.trf.xlu0
  %v1734 = vpop.trf.xlu0
  %v1735 = vpop.trf.xlu0
  %v1736 = vpop.trf.xlu0
  %v1737 = vpop.trf.xlu0
  %v1738 = vadd.f32 %v1722, %v1723
  %v1739 = vadd.f32 %v1738, %v1724
  %v1740 = vadd.f32 %v1739, %v1725
  %v1741 = vadd.f32 %v1740, %v1726
  %v1742 = vadd.f32 %v1741, %v1727
  %v1743 = vadd.f32 %v1742, %v1728
  %v1744 = vadd.f32 %v1743, %v1729
  %v1745 = vadd.f32 %v1744, %v1730
  %v1746 = vadd.f32 %v1745, %v1731
  %v1747 = vadd.f32 %v1746, %v1732
  %v1748 = vadd.f32 %v1747, %v1733
  %v1749 = vadd.f32 %v1748, %v1734
  %v1750 = vadd.f32 %v1749, %v1735
  %v1751 = vadd.f32 %v1750, %v1736
  %v1752 = vadd.f32 %v1751, %v1737
  %v1753 = vrot.slane %v1752, 4
  %v1754 = vadd.f32 %v1752, %v1753
  %v1755 = vrot.slane %v1754, 2
  %v1756 = vadd.f32 %v1754, %v1755
  %v1757 = vrot.slane %v1756, 1
  %v1758 = vadd.f32 %v1756, %v1757
  %s1759 = sld [smem:[#allocation3]]
  %v1760 = vstv %s1759
  %v1761 = vadd.f32 %v1758, %v1760
  %1762 = vst [vmem:[%s10] sm:$0x1] %v1761
  // Predicated region
  $region42: #{critic_forward.1} parent=0 // pred_check
    _
  $region43: #{critic_forward.1} parent=0 // pred_check_branch
    %1764 = sbr.rel (0) target = $region45
  $region44: #{critic_forward.1} parent=0 // pred_region
    _
  $region45: #{critic_forward.1} parent=0 // pred_fallthru
    _
  // Predicated region
  $region46: #{critic_forward.1} parent=0 // pred_check
    _
  $region47: #{critic_forward.1} parent=0 // pred_check_branch
    %1766 = sbr.rel (0) target = $region49
  $region48: #{critic_forward.1} parent=0 // pred_region
    _
  $region49: #{critic_forward.1} parent=0 // pred_fallthru
    _

</llo_original>
